<compile_context>
chip_gen: v7x
topology: tpu7x:2x2x1
jax: 0.10.0
libtpu: 0.0.40
codegen_flags: <defaults>
</compile_context>

<pallas_src>
import functools
import math

import jax
import jax.numpy as jnp
from jax import lax
from jax.experimental import pallas as pl
from jax.experimental.pallas import tpu as pltpu


def _lstm_recurrent_kernel(T_total, Tc, needs_mask,
                           gx_ref, h0_ref, c0_ref, w_hh_hbm,
                           out_ref, hn_ref, cn_ref,
                           w_scr, dma_sem, h_scr, c_scr):
    """One (batch-shard, time-block) grid step of the LSTM recurrence.

    gx_ref  : (Tc, Bs, 4H) bf16, precomputed x @ w_ih^T + b, gate order [i,f,o,g]
    w_hh_hbm: (H, 4H) bf16 raw HBM ref, DMA'd once per shard into w_scr
    h_scr/c_scr: (Bs, H) f32 carries across time blocks.
    """
    blk = pl.program_id(1)              # time-block index (sequential axis)
    H = h_scr.shape[-1]

    @pl.when(blk == 0)
    def _():
        # Single-buffered once-per-shard fetch of the invariant weight and
        # (re)initialisation of the f32 carries from this shard's h0/c0.
        cp = pltpu.make_async_copy(w_hh_hbm, w_scr, dma_sem.at[0])
        cp.start()
        h_scr[...] = h0_ref[...].astype(jnp.float32)
        c_scr[...] = c0_ref[...].astype(jnp.float32)
        cp.wait()

    w_hh_t = w_scr[...]                 # (H, 4H) bf16, loaded once per block
    t0 = blk * Tc

    def step(t, carry):
        h, c = carry                    # f32 (Bs, H)
        gates = gx_ref[t].astype(jnp.float32) + jnp.dot(
            h.astype(jnp.bfloat16), w_hh_t,
            preferred_element_type=jnp.float32)          # (Bs, 4H) f32
        sig = jax.nn.sigmoid(gates[:, :3 * H])           # [i | f | o] in one pass
        g_g = jnp.tanh(gates[:, 3 * H:])
        i_g = sig[:, :H]
        f_g = sig[:, H:2 * H]
        o_g = sig[:, 2 * H:]
        c_new = f_g * c + i_g * g_g
        h_new = o_g * jnp.tanh(c_new)
        if needs_mask:
            valid = (t0 + t) < T_total  # freeze carries on padded tail steps
            h_new = jnp.where(valid, h_new, h)
            c_new = jnp.where(valid, c_new, c)
        out_ref[t] = h_new.astype(out_ref.dtype)
        return h_new, c_new

    h, c = lax.fori_loop(0, Tc, step, (h_scr[...], c_scr[...]),
                         unroll=min(Tc, 8))
    h_scr[...] = h
    c_scr[...] = c
    # Write every block (robust vs. relying only on last-block residency); the
    # constant-index output block is flushed to HBM only when it retires.
    hn_ref[...] = h.astype(hn_ref.dtype)
    cn_ref[...] = c.astype(cn_ref.dtype)


def _physical_vmem_bytes():
    """Best-effort physical VMEM query; conservative (v7x) fallback."""
    try:
        info = pltpu.get_tpu_info()
        for name in ("vmem_capacity_bytes", "vmem_size_bytes", "vmem_bytes"):
            v = getattr(info, name, None)
            if v:
                return int(v)
    except Exception:
        pass
    return 64 * 1024 * 1024


def _reorder_gates(w):
    """PyTorch gate order [i, f, g, o] -> kernel order [i, f, o, g] (axis 0)."""
    i, f, g, o = jnp.split(w, 4, axis=0)
    return jnp.concatenate([i, f, o, g], axis=0)


def _lstm_layer(x, h0, c0, w_ih, w_hh, b_ih, b_hh, *,
                time_block=None, batch_shards=None):
    """x: (T, B, I); h0/c0: (B, H). Returns (out (T,B,H), h_n (B,H), c_n (B,H))."""
    T, B, I = x.shape
    H = h0.shape[-1]
    dt = x.dtype
    dt_bytes = jnp.dtype(dt).itemsize

    # ---- gate-column reorder [i,f,g,o] -> [i,f,o,g] (one sigmoid slab) ------
    w_ih_r = _reorder_gates(w_ih)                                  # (4H, I)
    w_hh_r = _reorder_gates(w_hh)                                  # (4H, H)
    bias = _reorder_gates(b_ih + b_hh).astype(jnp.float32)         # (4H,)

    # ---- hoisted input projection: one big GEMM over all T timesteps --------
    # Native-dtype MXU operands, f32 accumulation, bf16 HBM stream to kernel.
    gx = jnp.dot(x.reshape(T * B, I),
                 jnp.swapaxes(w_ih_r, 0, 1).astype(x.dtype),
                 preferred_element_type=jnp.float32) + bias[None, :]
    gx = gx.reshape(T, B, 4 * H).astype(jnp.bfloat16)

    # ---- recurrent weight: pre-transposed once, bf16 MXU operand ------------
    w_hh_t = jnp.swapaxes(w_hh_r, 0, 1).astype(jnp.bfloat16)        # (H, 4H)

    # ---- batch shards (v7x 2nd TensorCore); keep (8,128) tiling legal -------
    if batch_shards is None:
        batch_shards = 2 if (B % 16 == 0) else 1
    nb = batch_shards
    if nb < 1 or B % nb != 0 or (nb > 1 and (B // nb) % 8 != 0):
        nb = 1
    Bs = B // nb

    # ---- time blocking with padding + in-kernel masking ---------------------
    if time_block is None:
        per_t = 2 * Bs * (4 * H * 2 + H * dt_bytes)   # 2-buffered bytes / step
        time_block = max(1, (8 << 20) // max(per_t, 1))
    Tc = max(1, min(int(time_block), T))
    n_blk = -(-T // Tc)
    Tp = n_blk * Tc
    if Tp != T:
        gx = jnp.pad(gx, ((0, Tp - T), (0, 0), (0, 0)))

    # ---- VMEM budget (streaming slabs 2-buffered, invariants single) --------
    est = (2 * (Tc * Bs * 4 * H * 2 + Tc * Bs * H * dt_bytes)   # gx / out slabs
           + H * 4 * H * 2                                      # w_hh^T scratch
           + 2 * Bs * H * 4                                     # f32 h/c carries
           + 8 * Bs * H * dt_bytes)                             # h0/c0/h_n/c_n
    vmem_limit = None
    if est > (32 << 20):
        ceiling = max(32 << 20, _physical_vmem_bytes() - (12 << 20))
        vmem_limit = int(min(est + (est >> 2), ceiling))

    kernel = functools.partial(_lstm_recurrent_kernel, T, Tc, Tp != T)

    grid_spec = pltpu.PrefetchScalarGridSpec(
        num_scalar_prefetch=0,
        grid=(nb, n_blk),
        in_specs=[
            pl.BlockSpec((Tc, Bs, 4 * H), lambda s, b: (b, s, 0)),   # gx slab
            pl.BlockSpec((Bs, H), lambda s, b: (s, 0)),              # h0 shard
            pl.BlockSpec((Bs, H), lambda s, b: (s, 0)),              # c0 shard
            pl.BlockSpec(memory_space=pl.ANY),                       # w_hh^T (HBM)
        ],
        out_specs=[
            pl.BlockSpec((Tc, Bs, H), lambda s, b: (b, s, 0)),       # out slab
            pl.BlockSpec((Bs, H), lambda s, b: (s, 0)),              # h_n shard
            pl.BlockSpec((Bs, H), lambda s, b: (s, 0)),              # c_n shard
        ],
        scratch_shapes=[
            pltpu.VMEM((H, 4 * H), jnp.bfloat16),                    # resident w_hh^T
            pltpu.SemaphoreType.DMA((1,)),                           # its DMA sem
            pltpu.VMEM((Bs, H), jnp.float32),                        # h carry
            pltpu.VMEM((Bs, H), jnp.float32),                        # c carry
        ],
    )

    out, h_n, c_n = pl.pallas_call(
        kernel,
        out_shape=(
            jax.ShapeDtypeStruct((Tp, B, H), dt),
            jax.ShapeDtypeStruct((B, H), dt),
            jax.ShapeDtypeStruct((B, H), dt),
        ),
        grid_spec=grid_spec,
        compiler_params=pltpu.CompilerParams(
            dimension_semantics=("parallel", "arbitrary"),
            vmem_limit_bytes=vmem_limit),
    )(gx, h0, c0, w_hh_t)

    return out[:T], h_n, c_n


@functools.partial(jax.jit, static_argnames=("num_layers", "time_block"))
def lstm_forward(x, h0, c0, w_ih_list, w_hh_list, b_ih_list, b_hh_list,
                 num_layers, time_block=None):
    """Mirrors rnnbase.forward for mode='LSTM', unidirectional, batch_first=False.

    x:  (T, B, input_size); h0/c0: (num_layers, B, H).
    Returns (output (T, B, H), (h_n (L, B, H), c_n (L, B, H))).
    """
    layer_in = x
    h_n, c_n = [], []
    for layer in range(num_layers):
        layer_in, h_l, c_l = _lstm_layer(
            layer_in, h0[layer], c0[layer],
            w_ih_list[layer], w_hh_list[layer],
            b_ih_list[layer], b_hh_list[layer],
            time_block=time_block)
        h_n.append(h_l)
        c_n.append(c_l)
        # self.training=False path -> dropout between layers is a no-op.
    return layer_in, (jnp.stack(h_n, 0), jnp.stack(c_n, 0))


def _reference_lstm(x, h0, c0, w_ih_list, w_hh_list, b_ih_list, b_hh_list,
                    num_layers):
    """Plain-JAX f32 reference (same math as _VF.lstm) for a sanity check."""
    layer_in = x
    hs, cs = [], []
    for layer in range(num_layers):
        H = h0.shape[-1]
        w_ih, w_hh = w_ih_list[layer], w_hh_list[layer]
        b_ih, b_hh = b_ih_list[layer], b_hh_list[layer]
        h, c = h0[layer], c0[layer]
        outs = []
        for t in range(layer_in.shape[0]):
            g = layer_in[t] @ w_ih.T + h @ w_hh.T + b_ih + b_hh
            i = jax.nn.sigmoid(g[:, 0:H])
            f = jax.nn.sigmoid(g[:, H:2 * H])
            gg = jnp.tanh(g[:, 2 * H:3 * H])
            o = jax.nn.sigmoid(g[:, 3 * H:4 * H])
            c = f * c + i * gg
            h = o * jnp.tanh(c)
            outs.append(h)
        layer_in = jnp.stack(outs, axis=0)
        hs.append(h)
        cs.append(c)
    return layer_in, (jnp.stack(hs, 0), jnp.stack(cs, 0))


if __name__ == "__main__":
    # Small shapes consistent with rnnbase.forward (seq-major input).
    # T=20 with time_block=8 exercises the padded/masked tail block and the
    # cross-grid-step h/c carries; B=16 exercises the 2-shard parallel batch
    # axis while keeping every block (8,128)-legal.
    T, B = 20, 16
    input_size, hidden_size = 16, 32
    num_layers = 2
    dtype = jnp.float32

    key = jax.random.PRNGKey(0)
    stdv = 1.0 / math.sqrt(hidden_size)

    w_ih_list, w_hh_list, b_ih_list, b_hh_list = [], [], [], []
    for layer in range(num_layers):
        in_sz = input_size if layer == 0 else hidden_size
        key, k1, k2, k3, k4 = jax.random.split(key, 5)
        w_ih_list.append(jax.random.uniform(
            k1, (4 * hidden_size, in_sz), dtype, -stdv, stdv))
        w_hh_list.append(jax.random.uniform(
            k2, (4 * hidden_size, hidden_size), dtype, -stdv, stdv))
        b_ih_list.append(jax.random.uniform(
            k3, (4 * hidden_size,), dtype, -stdv, stdv))
        b_hh_list.append(jax.random.uniform(
            k4, (4 * hidden_size,), dtype, -stdv, stdv))

    key, kx = jax.random.split(key)
    x = jax.random.normal(kx, (T, B, input_size), dtype)
    # states=None path in rnnbase.forward -> zero-initialized (h, c).
    h0 = jnp.zeros((num_layers, B, hidden_size), dtype)
    c0 = jnp.zeros((num_layers, B, hidden_size), dtype)

    out, (h_n, c_n) = lstm_forward(
        x, h0, c0,
        tuple(w_ih_list), tuple(w_hh_list),
        tuple(b_ih_list), tuple(b_hh_list),
        num_layers, time_block=8)
    jax.block_until_ready((out, h_n, c_n))

    # Correctness sanity check vs plain-JAX f32 reference. The kernel runs the
    # MXU path (gx stream + recurrent matmul) in bf16 with f32 accumulation /
    # carries, so the tolerance is relaxed accordingly.
    ref_out, (ref_h, ref_c) = _reference_lstm(
        x, h0, c0, w_ih_list, w_hh_list, b_ih_list, b_hh_list, num_layers)
    assert out.shape == (T, B, hidden_size)
    assert h_n.shape == (num_layers, B, hidden_size)
    assert c_n.shape == (num_layers, B, hidden_size)
    assert jnp.allclose(out, ref_out, atol=5e-2, rtol=5e-2)
    assert jnp.allclose(h_n, ref_h, atol=5e-2, rtol=5e-2)
    assert jnp.allclose(c_n, ref_c, atol=5e-2, rtol=5e-2)

    print("KERNEL_OK")
</pallas_src>

<mosaic_0001>
module attributes {stable_mosaic.version = 11 : i64} {
  func.func @_lstm_recurrent_kernel(%arg0: i32, %arg1: i32, %arg2: memref<8x8x128xbf16, #tpu.memory_space<vmem>>, %arg3: memref<8x32xf32, #tpu.memory_space<vmem>>, %arg4: memref<8x32xf32, #tpu.memory_space<vmem>>, %arg5: memref<32x128xbf16, #tpu.memory_space<any>>, %arg6: memref<8x8x32xf32, #tpu.memory_space<vmem>>, %arg7: memref<8x32xf32, #tpu.memory_space<vmem>>, %arg8: memref<8x32xf32, #tpu.memory_space<vmem>>, %arg9: memref<32x128xbf16, #tpu.memory_space<vmem>>, %arg10: memref<1x!tpu.dma_semaphore, #tpu.memory_space<semaphore_mem>>, %arg11: memref<8x32xf32, #tpu.memory_space<vmem>>, %arg12: memref<8x32xf32, #tpu.memory_space<vmem>>) attributes {dimension_semantics = [#tpu.dimension_semantics<parallel>, #tpu.dimension_semantics<arbitrary>], iteration_bounds = array<i64: 2, 3>, scalar_prefetch = 0 : i64, scratch_operands = 4 : i64, tpu.core_type = #tpu.core_type<tc>, window_params = [{transform_indices = @transform_0, window_bounds = array<i64: 8, 8, 128>}, {transform_indices = @transform_1, window_bounds = array<i64: 8, 32>}, {transform_indices = @transform_2, window_bounds = array<i64: 8, 32>}, {}, {transform_indices = @transform_4, window_bounds = array<i64: 8, 8, 32>}, {transform_indices = @transform_5, window_bounds = array<i64: 8, 32>}, {transform_indices = @transform_6, window_bounds = array<i64: 8, 32>}]} {
    %c0_i32 = arith.constant 0 : i32
    %0 = arith.cmpi eq, %arg1, %c0_i32 : i32
    %1 = arith.extui %0 : i1 to i32
    %c0_i32_0 = arith.constant 0 : i32
    %2 = arith.cmpi ne, %1, %c0_i32_0 : i32
    scf.if %2 {
      %c0_i32_70 = arith.constant 0 : i32
      %259 = tpu.memref_slice %arg10[%c0_i32_70] : memref<1x!tpu.dma_semaphore, #tpu.memory_space<semaphore_mem>> -> memref<1x!tpu.dma_semaphore, #tpu.memory_space<semaphore_mem>>
      %260 = tpu.memref_squeeze %259 : memref<1x!tpu.dma_semaphore, #tpu.memory_space<semaphore_mem>> -> memref<!tpu.dma_semaphore, #tpu.memory_space<semaphore_mem>>
      tpu.enqueue_dma source(%arg5 : memref<32x128xbf16, #tpu.memory_space<any>>) target(%arg9 : memref<32x128xbf16, #tpu.memory_space<vmem>>) target_semaphore(%260 : memref<!tpu.dma_semaphore, #tpu.memory_space<semaphore_mem>>)
      %c0_71 = arith.constant 0 : index
      %c0_72 = arith.constant 0 : index
      %261 = vector.load %arg3[%c0_71, %c0_72] : memref<8x32xf32, #tpu.memory_space<vmem>>, vector<8x32xf32>
      %c0_73 = arith.constant 0 : index
      %c0_74 = arith.constant 0 : index
      %262 = vector.load %arg11[%c0_73, %c0_74] : memref<8x32xf32, #tpu.memory_space<vmem>>, vector<8x32xf32>
      tpu.vector_store %arg11[%c0_73, %c0_74], %261 {strides = array<i32>} : memref<8x32xf32, #tpu.memory_space<vmem>>, vector<8x32xf32>,
      %c0_75 = arith.constant 0 : index
      %c0_76 = arith.constant 0 : index
      %263 = vector.load %arg4[%c0_75, %c0_76] : memref<8x32xf32, #tpu.memory_space<vmem>>, vector<8x32xf32>
      %c0_77 = arith.constant 0 : index
      %c0_78 = arith.constant 0 : index
      %264 = vector.load %arg12[%c0_77, %c0_78] : memref<8x32xf32, #tpu.memory_space<vmem>>, vector<8x32xf32>
      tpu.vector_store %arg12[%c0_77, %c0_78], %263 {strides = array<i32>} : memref<8x32xf32, #tpu.memory_space<vmem>>, vector<8x32xf32>,
      %c0_i32_79 = arith.constant 0 : i32
      %265 = tpu.memref_slice %arg10[%c0_i32_79] : memref<1x!tpu.dma_semaphore, #tpu.memory_space<semaphore_mem>> -> memref<1x!tpu.dma_semaphore, #tpu.memory_space<semaphore_mem>>
      %266 = tpu.memref_squeeze %265 : memref<1x!tpu.dma_semaphore, #tpu.memory_space<semaphore_mem>> -> memref<!tpu.dma_semaphore, #tpu.memory_space<semaphore_mem>>
      tpu.wait_dma2 semaphore(%266 : memref<!tpu.dma_semaphore, #tpu.memory_space<semaphore_mem>>) src(%arg5 : memref<32x128xbf16, #tpu.memory_space<any>>) dst(%arg9 : memref<32x128xbf16, #tpu.memory_space<vmem>>)
    } else {
    }
    %c0 = arith.constant 0 : index
    %c0_1 = arith.constant 0 : index
    %3 = vector.load %arg9[%c0, %c0_1] : memref<32x128xbf16, #tpu.memory_space<vmem>>, vector<32x128xbf16>
    %c8_i32 = arith.constant 8 : i32
    %4 = arith.muli %arg1, %c8_i32 : i32
    %c0_2 = arith.constant 0 : index
    %c0_3 = arith.constant 0 : index
    %5 = vector.load %arg11[%c0_2, %c0_3] : memref<8x32xf32, #tpu.memory_space<vmem>>, vector<8x32xf32>
    %c0_4 = arith.constant 0 : index
    %c0_5 = arith.constant 0 : index
    %6 = vector.load %arg12[%c0_4, %c0_5] : memref<8x32xf32, #tpu.memory_space<vmem>>, vector<8x32xf32>
    %c0_i32_6 = arith.constant 0 : i32
    %7 = arith.index_cast %c0_i32_6 : i32 to index
    %c0_7 = arith.constant 0 : index
    %c0_8 = arith.constant 0 : index
    %8 = vector.load %arg2[%7, %c0_7, %c0_8] : memref<8x8x128xbf16, #tpu.memory_space<vmem>>, vector<1x8x128xbf16>
    %9 = vector.shape_cast %8 : vector<1x8x128xbf16> to vector<8x128xbf16>
    %10 = arith.extf %9 : vector<8x128xbf16> to vector<8x128xf32>
    %11 = arith.truncf %5 : vector<8x32xf32> to vector<8x32xbf16>
    %cst = arith.constant dense<0.000000e+00> : vector<8x128xf32>
    %12 = tpu.matmul %11, %3, %cst {dimension_numbers = #tpu.dot_dimension_numbers<[1], [0], [0], [1], [0, 0, 1, 1], [], []>} : vector<8x32xbf16>, vector<32x128xbf16>, vector<8x128xf32> -> vector<8x128xf32>
    %13 = arith.addf %10, %12 : vector<8x128xf32>
    %14 = vector.extract_strided_slice %13 {offsets = [0, 0], sizes = [8, 96], strides = [1, 1]} : vector<8x128xf32> to vector<8x96xf32>
    %15 = arith.negf %14 : vector<8x96xf32>
    %16 = math.exp %15 : vector<8x96xf32>
    %cst_9 = arith.constant 1.000000e+00 : f32
    %17 = vector.broadcast %cst_9 : f32 to vector<8x96xf32>
    %18 = arith.addf %17, %16 : vector<8x96xf32>
    %19 = arith.divf %17, %18 : vector<8x96xf32>
    %20 = vector.extract_strided_slice %13 {offsets = [0, 96], sizes = [8, 32], strides = [1, 1]} : vector<8x128xf32> to vector<8x32xf32>
    %21 = math.tanh %20 : vector<8x32xf32>
    %22 = vector.extract_strided_slice %19 {offsets = [0, 0], sizes = [8, 32], strides = [1, 1]} : vector<8x96xf32> to vector<8x32xf32>
    %23 = vector.extract_strided_slice %19 {offsets = [0, 32], sizes = [8, 32], strides = [1, 1]} : vector<8x96xf32> to vector<8x32xf32>
    %24 = vector.extract_strided_slice %19 {offsets = [0, 64], sizes = [8, 32], strides = [1, 1]} : vector<8x96xf32> to vector<8x32xf32>
    %25 = arith.mulf %23, %6 : vector<8x32xf32>
    %26 = arith.mulf %22, %21 : vector<8x32xf32>
    %27 = arith.addf %25, %26 : vector<8x32xf32>
    %28 = math.tanh %27 : vector<8x32xf32>
    %29 = arith.mulf %24, %28 : vector<8x32xf32>
    %30 = arith.addi %4, %c0_i32_6 : i32
    %c20_i32 = arith.constant 20 : i32
    %31 = arith.cmpi slt, %30, %c20_i32 : i32
    %32 = arith.select %31, %29, %5 : vector<8x32xf32>
    %33 = arith.select %31, %27, %6 : vector<8x32xf32>
    %34 = arith.index_cast %c0_i32_6 : i32 to index
    %c0_10 = arith.constant 0 : index
    %c0_11 = arith.constant 0 : index
    %35 = vector.load %arg6[%34, %c0_10, %c0_11] : memref<8x8x32xf32, #tpu.memory_space<vmem>>, vector<1x8x32xf32>
    %36 = vector.shape_cast %35 : vector<1x8x32xf32> to vector<8x32xf32>
    %37 = vector.shape_cast %32 : vector<8x32xf32> to vector<1x8x32xf32>
    tpu.vector_store %arg6[%34, %c0_10, %c0_11], %37 {strides = array<i32>} : memref<8x8x32xf32, #tpu.memory_space<vmem>>, vector<1x8x32xf32>,
    %c1_i32 = arith.constant 1 : i32
    %38 = arith.index_cast %c1_i32 : i32 to index
    %c0_12 = arith.constant 0 : index
    %c0_13 = arith.constant 0 : index
    %39 = vector.load %arg2[%38, %c0_12, %c0_13] : memref<8x8x128xbf16, #tpu.memory_space<vmem>>, vector<1x8x128xbf16>
    %40 = vector.shape_cast %39 : vector<1x8x128xbf16> to vector<8x128xbf16>
    %41 = arith.extf %40 : vector<8x128xbf16> to vector<8x128xf32>
    %42 = arith.truncf %32 : vector<8x32xf32> to vector<8x32xbf16>
    %cst_14 = arith.constant dense<0.000000e+00> : vector<8x128xf32>
    %43 = tpu.matmul %42, %3, %cst_14 {dimension_numbers = #tpu.dot_dimension_numbers<[1], [0], [0], [1], [0, 0, 1, 1], [], []>} : vector<8x32xbf16>, vector<32x128xbf16>, vector<8x128xf32> -> vector<8x128xf32>
    %44 = arith.addf %41, %43 : vector<8x128xf32>
    %45 = vector.extract_strided_slice %44 {offsets = [0, 0], sizes = [8, 96], strides = [1, 1]} : vector<8x128xf32> to vector<8x96xf32>
    %46 = arith.negf %45 : vector<8x96xf32>
    %47 = math.exp %46 : vector<8x96xf32>
    %cst_15 = arith.constant 1.000000e+00 : f32
    %48 = vector.broadcast %cst_15 : f32 to vector<8x96xf32>
    %49 = arith.addf %48, %47 : vector<8x96xf32>
    %50 = arith.divf %48, %49 : vector<8x96xf32>
    %51 = vector.extract_strided_slice %44 {offsets = [0, 96], sizes = [8, 32], strides = [1, 1]} : vector<8x128xf32> to vector<8x32xf32>
    %52 = math.tanh %51 : vector<8x32xf32>
    %53 = vector.extract_strided_slice %50 {offsets = [0, 0], sizes = [8, 32], strides = [1, 1]} : vector<8x96xf32> to vector<8x32xf32>
    %54 = vector.extract_strided_slice %50 {offsets = [0, 32], sizes = [8, 32], strides = [1, 1]} : vector<8x96xf32> to vector<8x32xf32>
    %55 = vector.extract_strided_slice %50 {offsets = [0, 64], sizes = [8, 32], strides = [1, 1]} : vector<8x96xf32> to vector<8x32xf32>
    %56 = arith.mulf %54, %33 : vector<8x32xf32>
    %57 = arith.mulf %53, %52 : vector<8x32xf32>
    %58 = arith.addf %56, %57 : vector<8x32xf32>
    %59 = math.tanh %58 : vector<8x32xf32>
    %60 = arith.mulf %55, %59 : vector<8x32xf32>
    %61 = arith.addi %4, %c1_i32 : i32
    %c20_i32_16 = arith.constant 20 : i32
    %62 = arith.cmpi slt, %61, %c20_i32_16 : i32
    %63 = arith.select %62, %60, %32 : vector<8x32xf32>
    %64 = arith.select %62, %58, %33 : vector<8x32xf32>
    %65 = arith.index_cast %c1_i32 : i32 to index
    %c0_17 = arith.constant 0 : index
    %c0_18 = arith.constant 0 : index
    %66 = vector.load %arg6[%65, %c0_17, %c0_18] : memref<8x8x32xf32, #tpu.memory_space<vmem>>, vector<1x8x32xf32>
    %67 = vector.shape_cast %66 : vector<1x8x32xf32> to vector<8x32xf32>
    %68 = vector.shape_cast %63 : vector<8x32xf32> to vector<1x8x32xf32>
    tpu.vector_store %arg6[%65, %c0_17, %c0_18], %68 {strides = array<i32>} : memref<8x8x32xf32, #tpu.memory_space<vmem>>, vector<1x8x32xf32>,
    %c2_i32 = arith.constant 2 : i32
    %69 = arith.index_cast %c2_i32 : i32 to index
    %c0_19 = arith.constant 0 : index
    %c0_20 = arith.constant 0 : index
    %70 = vector.load %arg2[%69, %c0_19, %c0_20] : memref<8x8x128xbf16, #tpu.memory_space<vmem>>, vector<1x8x128xbf16>
    %71 = vector.shape_cast %70 : vector<1x8x128xbf16> to vector<8x128xbf16>
    %72 = arith.extf %71 : vector<8x128xbf16> to vector<8x128xf32>
    %73 = arith.truncf %63 : vector<8x32xf32> to vector<8x32xbf16>
    %cst_21 = arith.constant dense<0.000000e+00> : vector<8x128xf32>
    %74 = tpu.matmul %73, %3, %cst_21 {dimension_numbers = #tpu.dot_dimension_numbers<[1], [0], [0], [1], [0, 0, 1, 1], [], []>} : vector<8x32xbf16>, vector<32x128xbf16>, vector<8x128xf32> -> vector<8x128xf32>
    %75 = arith.addf %72, %74 : vector<8x128xf32>
    %76 = vector.extract_strided_slice %75 {offsets = [0, 0], sizes = [8, 96], strides = [1, 1]} : vector<8x128xf32> to vector<8x96xf32>
    %77 = arith.negf %76 : vector<8x96xf32>
    %78 = math.exp %77 : vector<8x96xf32>
    %cst_22 = arith.constant 1.000000e+00 : f32
    %79 = vector.broadcast %cst_22 : f32 to vector<8x96xf32>
    %80 = arith.addf %79, %78 : vector<8x96xf32>
    %81 = arith.divf %79, %80 : vector<8x96xf32>
    %82 = vector.extract_strided_slice %75 {offsets = [0, 96], sizes = [8, 32], strides = [1, 1]} : vector<8x128xf32> to vector<8x32xf32>
    %83 = math.tanh %82 : vector<8x32xf32>
    %84 = vector.extract_strided_slice %81 {offsets = [0, 0], sizes = [8, 32], strides = [1, 1]} : vector<8x96xf32> to vector<8x32xf32>
    %85 = vector.extract_strided_slice %81 {offsets = [0, 32], sizes = [8, 32], strides = [1, 1]} : vector<8x96xf32> to vector<8x32xf32>
    %86 = vector.extract_strided_slice %81 {offsets = [0, 64], sizes = [8, 32], strides = [1, 1]} : vector<8x96xf32> to vector<8x32xf32>
    %87 = arith.mulf %85, %64 : vector<8x32xf32>
    %88 = arith.mulf %84, %83 : vector<8x32xf32>
    %89 = arith.addf %87, %88 : vector<8x32xf32>
    %90 = math.tanh %89 : vector<8x32xf32>
    %91 = arith.mulf %86, %90 : vector<8x32xf32>
    %92 = arith.addi %4, %c2_i32 : i32
    %c20_i32_23 = arith.constant 20 : i32
    %93 = arith.cmpi slt, %92, %c20_i32_23 : i32
    %94 = arith.select %93, %91, %63 : vector<8x32xf32>
    %95 = arith.select %93, %89, %64 : vector<8x32xf32>
    %96 = arith.index_cast %c2_i32 : i32 to index
    %c0_24 = arith.constant 0 : index
    %c0_25 = arith.constant 0 : index
    %97 = vector.load %arg6[%96, %c0_24, %c0_25] : memref<8x8x32xf32, #tpu.memory_space<vmem>>, vector<1x8x32xf32>
    %98 = vector.shape_cast %97 : vector<1x8x32xf32> to vector<8x32xf32>
    %99 = vector.shape_cast %94 : vector<8x32xf32> to vector<1x8x32xf32>
    tpu.vector_store %arg6[%96, %c0_24, %c0_25], %99 {strides = array<i32>} : memref<8x8x32xf32, #tpu.memory_space<vmem>>, vector<1x8x32xf32>,
    %c3_i32 = arith.constant 3 : i32
    %100 = arith.index_cast %c3_i32 : i32 to index
    %c0_26 = arith.constant 0 : index
    %c0_27 = arith.constant 0 : index
    %101 = vector.load %arg2[%100, %c0_26, %c0_27] : memref<8x8x128xbf16, #tpu.memory_space<vmem>>, vector<1x8x128xbf16>
    %102 = vector.shape_cast %101 : vector<1x8x128xbf16> to vector<8x128xbf16>
    %103 = arith.extf %102 : vector<8x128xbf16> to vector<8x128xf32>
    %104 = arith.truncf %94 : vector<8x32xf32> to vector<8x32xbf16>
    %cst_28 = arith.constant dense<0.000000e+00> : vector<8x128xf32>
    %105 = tpu.matmul %104, %3, %cst_28 {dimension_numbers = #tpu.dot_dimension_numbers<[1], [0], [0], [1], [0, 0, 1, 1], [], []>} : vector<8x32xbf16>, vector<32x128xbf16>, vector<8x128xf32> -> vector<8x128xf32>
    %106 = arith.addf %103, %105 : vector<8x128xf32>
    %107 = vector.extract_strided_slice %106 {offsets = [0, 0], sizes = [8, 96], strides = [1, 1]} : vector<8x128xf32> to vector<8x96xf32>
    %108 = arith.negf %107 : vector<8x96xf32>
    %109 = math.exp %108 : vector<8x96xf32>
    %cst_29 = arith.constant 1.000000e+00 : f32
    %110 = vector.broadcast %cst_29 : f32 to vector<8x96xf32>
    %111 = arith.addf %110, %109 : vector<8x96xf32>
    %112 = arith.divf %110, %111 : vector<8x96xf32>
    %113 = vector.extract_strided_slice %106 {offsets = [0, 96], sizes = [8, 32], strides = [1, 1]} : vector<8x128xf32> to vector<8x32xf32>
    %114 = math.tanh %113 : vector<8x32xf32>
    %115 = vector.extract_strided_slice %112 {offsets = [0, 0], sizes = [8, 32], strides = [1, 1]} : vector<8x96xf32> to vector<8x32xf32>
    %116 = vector.extract_strided_slice %112 {offsets = [0, 32], sizes = [8, 32], strides = [1, 1]} : vector<8x96xf32> to vector<8x32xf32>
    %117 = vector.extract_strided_slice %112 {offsets = [0, 64], sizes = [8, 32], strides = [1, 1]} : vector<8x96xf32> to vector<8x32xf32>
    %118 = arith.mulf %116, %95 : vector<8x32xf32>
    %119 = arith.mulf %115, %114 : vector<8x32xf32>
    %120 = arith.addf %118, %119 : vector<8x32xf32>
    %121 = math.tanh %120 : vector<8x32xf32>
    %122 = arith.mulf %117, %121 : vector<8x32xf32>
    %123 = arith.addi %4, %c3_i32 : i32
    %c20_i32_30 = arith.constant 20 : i32
    %124 = arith.cmpi slt, %123, %c20_i32_30 : i32
    %125 = arith.select %124, %122, %94 : vector<8x32xf32>
    %126 = arith.select %124, %120, %95 : vector<8x32xf32>
    %127 = arith.index_cast %c3_i32 : i32 to index
    %c0_31 = arith.constant 0 : index
    %c0_32 = arith.constant 0 : index
    %128 = vector.load %arg6[%127, %c0_31, %c0_32] : memref<8x8x32xf32, #tpu.memory_space<vmem>>, vector<1x8x32xf32>
    %129 = vector.shape_cast %128 : vector<1x8x32xf32> to vector<8x32xf32>
    %130 = vector.shape_cast %125 : vector<8x32xf32> to vector<1x8x32xf32>
    tpu.vector_store %arg6[%127, %c0_31, %c0_32], %130 {strides = array<i32>} : memref<8x8x32xf32, #tpu.memory_space<vmem>>, vector<1x8x32xf32>,
    %c4_i32 = arith.constant 4 : i32
    %131 = arith.index_cast %c4_i32 : i32 to index
    %c0_33 = arith.constant 0 : index
    %c0_34 = arith.constant 0 : index
    %132 = vector.load %arg2[%131, %c0_33, %c0_34] : memref<8x8x128xbf16, #tpu.memory_space<vmem>>, vector<1x8x128xbf16>
    %133 = vector.shape_cast %132 : vector<1x8x128xbf16> to vector<8x128xbf16>
    %134 = arith.extf %133 : vector<8x128xbf16> to vector<8x128xf32>
    %135 = arith.truncf %125 : vector<8x32xf32> to vector<8x32xbf16>
    %cst_35 = arith.constant dense<0.000000e+00> : vector<8x128xf32>
    %136 = tpu.matmul %135, %3, %cst_35 {dimension_numbers = #tpu.dot_dimension_numbers<[1], [0], [0], [1], [0, 0, 1, 1], [], []>} : vector<8x32xbf16>, vector<32x128xbf16>, vector<8x128xf32> -> vector<8x128xf32>
    %137 = arith.addf %134, %136 : vector<8x128xf32>
    %138 = vector.extract_strided_slice %137 {offsets = [0, 0], sizes = [8, 96], strides = [1, 1]} : vector<8x128xf32> to vector<8x96xf32>
    %139 = arith.negf %138 : vector<8x96xf32>
    %140 = math.exp %139 : vector<8x96xf32>
    %cst_36 = arith.constant 1.000000e+00 : f32
    %141 = vector.broadcast %cst_36 : f32 to vector<8x96xf32>
    %142 = arith.addf %141, %140 : vector<8x96xf32>
    %143 = arith.divf %141, %142 : vector<8x96xf32>
    %144 = vector.extract_strided_slice %137 {offsets = [0, 96], sizes = [8, 32], strides = [1, 1]} : vector<8x128xf32> to vector<8x32xf32>
    %145 = math.tanh %144 : vector<8x32xf32>
    %146 = vector.extract_strided_slice %143 {offsets = [0, 0], sizes = [8, 32], strides = [1, 1]} : vector<8x96xf32> to vector<8x32xf32>
    %147 = vector.extract_strided_slice %143 {offsets = [0, 32], sizes = [8, 32], strides = [1, 1]} : vector<8x96xf32> to vector<8x32xf32>
    %148 = vector.extract_strided_slice %143 {offsets = [0, 64], sizes = [8, 32], strides = [1, 1]} : vector<8x96xf32> to vector<8x32xf32>
    %149 = arith.mulf %147, %126 : vector<8x32xf32>
    %150 = arith.mulf %146, %145 : vector<8x32xf32>
    %151 = arith.addf %149, %150 : vector<8x32xf32>
    %152 = math.tanh %151 : vector<8x32xf32>
    %153 = arith.mulf %148, %152 : vector<8x32xf32>
    %154 = arith.addi %4, %c4_i32 : i32
    %c20_i32_37 = arith.constant 20 : i32
    %155 = arith.cmpi slt, %154, %c20_i32_37 : i32
    %156 = arith.select %155, %153, %125 : vector<8x32xf32>
    %157 = arith.select %155, %151, %126 : vector<8x32xf32>
    %158 = arith.index_cast %c4_i32 : i32 to index
    %c0_38 = arith.constant 0 : index
    %c0_39 = arith.constant 0 : index
    %159 = vector.load %arg6[%158, %c0_38, %c0_39] : memref<8x8x32xf32, #tpu.memory_space<vmem>>, vector<1x8x32xf32>
    %160 = vector.shape_cast %159 : vector<1x8x32xf32> to vector<8x32xf32>
    %161 = vector.shape_cast %156 : vector<8x32xf32> to vector<1x8x32xf32>
    tpu.vector_store %arg6[%158, %c0_38, %c0_39], %161 {strides = array<i32>} : memref<8x8x32xf32, #tpu.memory_space<vmem>>, vector<1x8x32xf32>,
    %c5_i32 = arith.constant 5 : i32
    %162 = arith.index_cast %c5_i32 : i32 to index
    %c0_40 = arith.constant 0 : index
    %c0_41 = arith.constant 0 : index
    %163 = vector.load %arg2[%162, %c0_40, %c0_41] : memref<8x8x128xbf16, #tpu.memory_space<vmem>>, vector<1x8x128xbf16>
    %164 = vector.shape_cast %163 : vector<1x8x128xbf16> to vector<8x128xbf16>
    %165 = arith.extf %164 : vector<8x128xbf16> to vector<8x128xf32>
    %166 = arith.truncf %156 : vector<8x32xf32> to vector<8x32xbf16>
    %cst_42 = arith.constant dense<0.000000e+00> : vector<8x128xf32>
    %167 = tpu.matmul %166, %3, %cst_42 {dimension_numbers = #tpu.dot_dimension_numbers<[1], [0], [0], [1], [0, 0, 1, 1], [], []>} : vector<8x32xbf16>, vector<32x128xbf16>, vector<8x128xf32> -> vector<8x128xf32>
    %168 = arith.addf %165, %167 : vector<8x128xf32>
    %169 = vector.extract_strided_slice %168 {offsets = [0, 0], sizes = [8, 96], strides = [1, 1]} : vector<8x128xf32> to vector<8x96xf32>
    %170 = arith.negf %169 : vector<8x96xf32>
    %171 = math.exp %170 : vector<8x96xf32>
    %cst_43 = arith.constant 1.000000e+00 : f32
    %172 = vector.broadcast %cst_43 : f32 to vector<8x96xf32>
    %173 = arith.addf %172, %171 : vector<8x96xf32>
    %174 = arith.divf %172, %173 : vector<8x96xf32>
    %175 = vector.extract_strided_slice %168 {offsets = [0, 96], sizes = [8, 32], strides = [1, 1]} : vector<8x128xf32> to vector<8x32xf32>
    %176 = math.tanh %175 : vector<8x32xf32>
    %177 = vector.extract_strided_slice %174 {offsets = [0, 0], sizes = [8, 32], strides = [1, 1]} : vector<8x96xf32> to vector<8x32xf32>
    %178 = vector.extract_strided_slice %174 {offsets = [0, 32], sizes = [8, 32], strides = [1, 1]} : vector<8x96xf32> to vector<8x32xf32>
    %179 = vector.extract_strided_slice %174 {offsets = [0, 64], sizes = [8, 32], strides = [1, 1]} : vector<8x96xf32> to vector<8x32xf32>
    %180 = arith.mulf %178, %157 : vector<8x32xf32>
    %181 = arith.mulf %177, %176 : vector<8x32xf32>
    %182 = arith.addf %180, %181 : vector<8x32xf32>
    %183 = math.tanh %182 : vector<8x32xf32>
    %184 = arith.mulf %179, %183 : vector<8x32xf32>
    %185 = arith.addi %4, %c5_i32 : i32
    %c20_i32_44 = arith.constant 20 : i32
    %186 = arith.cmpi slt, %185, %c20_i32_44 : i32
    %187 = arith.select %186, %184, %156 : vector<8x32xf32>
    %188 = arith.select %186, %182, %157 : vector<8x32xf32>
    %189 = arith.index_cast %c5_i32 : i32 to index
    %c0_45 = arith.constant 0 : index
    %c0_46 = arith.constant 0 : index
    %190 = vector.load %arg6[%189, %c0_45, %c0_46] : memref<8x8x32xf32, #tpu.memory_space<vmem>>, vector<1x8x32xf32>
    %191 = vector.shape_cast %190 : vector<1x8x32xf32> to vector<8x32xf32>
    %192 = vector.shape_cast %187 : vector<8x32xf32> to vector<1x8x32xf32>
    tpu.vector_store %arg6[%189, %c0_45, %c0_46], %192 {strides = array<i32>} : memref<8x8x32xf32, #tpu.memory_space<vmem>>, vector<1x8x32xf32>,
    %c6_i32 = arith.constant 6 : i32
    %193 = arith.index_cast %c6_i32 : i32 to index
    %c0_47 = arith.constant 0 : index
    %c0_48 = arith.constant 0 : index
    %194 = vector.load %arg2[%193, %c0_47, %c0_48] : memref<8x8x128xbf16, #tpu.memory_space<vmem>>, vector<1x8x128xbf16>
    %195 = vector.shape_cast %194 : vector<1x8x128xbf16> to vector<8x128xbf16>
    %196 = arith.extf %195 : vector<8x128xbf16> to vector<8x128xf32>
    %197 = arith.truncf %187 : vector<8x32xf32> to vector<8x32xbf16>
    %cst_49 = arith.constant dense<0.000000e+00> : vector<8x128xf32>
    %198 = tpu.matmul %197, %3, %cst_49 {dimension_numbers = #tpu.dot_dimension_numbers<[1], [0], [0], [1], [0, 0, 1, 1], [], []>} : vector<8x32xbf16>, vector<32x128xbf16>, vector<8x128xf32> -> vector<8x128xf32>
    %199 = arith.addf %196, %198 : vector<8x128xf32>
    %200 = vector.extract_strided_slice %199 {offsets = [0, 0], sizes = [8, 96], strides = [1, 1]} : vector<8x128xf32> to vector<8x96xf32>
    %201 = arith.negf %200 : vector<8x96xf32>
    %202 = math.exp %201 : vector<8x96xf32>
    %cst_50 = arith.constant 1.000000e+00 : f32
    %203 = vector.broadcast %cst_50 : f32 to vector<8x96xf32>
    %204 = arith.addf %203, %202 : vector<8x96xf32>
    %205 = arith.divf %203, %204 : vector<8x96xf32>
    %206 = vector.extract_strided_slice %199 {offsets = [0, 96], sizes = [8, 32], strides = [1, 1]} : vector<8x128xf32> to vector<8x32xf32>
    %207 = math.tanh %206 : vector<8x32xf32>
    %208 = vector.extract_strided_slice %205 {offsets = [0, 0], sizes = [8, 32], strides = [1, 1]} : vector<8x96xf32> to vector<8x32xf32>
    %209 = vector.extract_strided_slice %205 {offsets = [0, 32], sizes = [8, 32], strides = [1, 1]} : vector<8x96xf32> to vector<8x32xf32>
    %210 = vector.extract_strided_slice %205 {offsets = [0, 64], sizes = [8, 32], strides = [1, 1]} : vector<8x96xf32> to vector<8x32xf32>
    %211 = arith.mulf %209, %188 : vector<8x32xf32>
    %212 = arith.mulf %208, %207 : vector<8x32xf32>
    %213 = arith.addf %211, %212 : vector<8x32xf32>
    %214 = math.tanh %213 : vector<8x32xf32>
    %215 = arith.mulf %210, %214 : vector<8x32xf32>
    %216 = arith.addi %4, %c6_i32 : i32
    %c20_i32_51 = arith.constant 20 : i32
    %217 = arith.cmpi slt, %216, %c20_i32_51 : i32
    %218 = arith.select %217, %215, %187 : vector<8x32xf32>
    %219 = arith.select %217, %213, %188 : vector<8x32xf32>
    %220 = arith.index_cast %c6_i32 : i32 to index
    %c0_52 = arith.constant 0 : index
    %c0_53 = arith.constant 0 : index
    %221 = vector.load %arg6[%220, %c0_52, %c0_53] : memref<8x8x32xf32, #tpu.memory_space<vmem>>, vector<1x8x32xf32>
    %222 = vector.shape_cast %221 : vector<1x8x32xf32> to vector<8x32xf32>
    %223 = vector.shape_cast %218 : vector<8x32xf32> to vector<1x8x32xf32>
    tpu.vector_store %arg6[%220, %c0_52, %c0_53], %223 {strides = array<i32>} : memref<8x8x32xf32, #tpu.memory_space<vmem>>, vector<1x8x32xf32>,
    %c7_i32 = arith.constant 7 : i32
    %224 = arith.index_cast %c7_i32 : i32 to index
    %c0_54 = arith.constant 0 : index
    %c0_55 = arith.constant 0 : index
    %225 = vector.load %arg2[%224, %c0_54, %c0_55] : memref<8x8x128xbf16, #tpu.memory_space<vmem>>, vector<1x8x128xbf16>
    %226 = vector.shape_cast %225 : vector<1x8x128xbf16> to vector<8x128xbf16>
    %227 = arith.extf %226 : vector<8x128xbf16> to vector<8x128xf32>
    %228 = arith.truncf %218 : vector<8x32xf32> to vector<8x32xbf16>
    %cst_56 = arith.constant dense<0.000000e+00> : vector<8x128xf32>
    %229 = tpu.matmul %228, %3, %cst_56 {dimension_numbers = #tpu.dot_dimension_numbers<[1], [0], [0], [1], [0, 0, 1, 1], [], []>} : vector<8x32xbf16>, vector<32x128xbf16>, vector<8x128xf32> -> vector<8x128xf32>
    %230 = arith.addf %227, %229 : vector<8x128xf32>
    %231 = vector.extract_strided_slice %230 {offsets = [0, 0], sizes = [8, 96], strides = [1, 1]} : vector<8x128xf32> to vector<8x96xf32>
    %232 = arith.negf %231 : vector<8x96xf32>
    %233 = math.exp %232 : vector<8x96xf32>
    %cst_57 = arith.constant 1.000000e+00 : f32
    %234 = vector.broadcast %cst_57 : f32 to vector<8x96xf32>
    %235 = arith.addf %234, %233 : vector<8x96xf32>
    %236 = arith.divf %234, %235 : vector<8x96xf32>
    %237 = vector.extract_strided_slice %230 {offsets = [0, 96], sizes = [8, 32], strides = [1, 1]} : vector<8x128xf32> to vector<8x32xf32>
    %238 = math.tanh %237 : vector<8x32xf32>
    %239 = vector.extract_strided_slice %236 {offsets = [0, 0], sizes = [8, 32], strides = [1, 1]} : vector<8x96xf32> to vector<8x32xf32>
    %240 = vector.extract_strided_slice %236 {offsets = [0, 32], sizes = [8, 32], strides = [1, 1]} : vector<8x96xf32> to vector<8x32xf32>
    %241 = vector.extract_strided_slice %236 {offsets = [0, 64], sizes = [8, 32], strides = [1, 1]} : vector<8x96xf32> to vector<8x32xf32>
    %242 = arith.mulf %240, %219 : vector<8x32xf32>
    %243 = arith.mulf %239, %238 : vector<8x32xf32>
    %244 = arith.addf %242, %243 : vector<8x32xf32>
    %245 = math.tanh %244 : vector<8x32xf32>
    %246 = arith.mulf %241, %245 : vector<8x32xf32>
    %247 = arith.addi %4, %c7_i32 : i32
    %c20_i32_58 = arith.constant 20 : i32
    %248 = arith.cmpi slt, %247, %c20_i32_58 : i32
    %249 = arith.select %248, %246, %218 : vector<8x32xf32>
    %250 = arith.select %248, %244, %219 : vector<8x32xf32>
    %251 = arith.index_cast %c7_i32 : i32 to index
    %c0_59 = arith.constant 0 : index
    %c0_60 = arith.constant 0 : index
    %252 = vector.load %arg6[%251, %c0_59, %c0_60] : memref<8x8x32xf32, #tpu.memory_space<vmem>>, vector<1x8x32xf32>
    %253 = vector.shape_cast %252 : vector<1x8x32xf32> to vector<8x32xf32>
    %254 = vector.shape_cast %249 : vector<8x32xf32> to vector<1x8x32xf32>
    tpu.vector_store %arg6[%251, %c0_59, %c0_60], %254 {strides = array<i32>} : memref<8x8x32xf32, #tpu.memory_space<vmem>>, vector<1x8x32xf32>,
    %c8_i32_61 = arith.constant 8 : i32
    %c0_62 = arith.constant 0 : index
    %c0_63 = arith.constant 0 : index
    %255 = vector.load %arg11[%c0_62, %c0_63] : memref<8x32xf32, #tpu.memory_space<vmem>>, vector<8x32xf32>
    tpu.vector_store %arg11[%c0_62, %c0_63], %249 {strides = array<i32>} : memref<8x32xf32, #tpu.memory_space<vmem>>, vector<8x32xf32>,
    %c0_64 = arith.constant 0 : index
    %c0_65 = arith.constant 0 : index
    %256 = vector.load %arg12[%c0_64, %c0_65] : memref<8x32xf32, #tpu.memory_space<vmem>>, vector<8x32xf32>
    tpu.vector_store %arg12[%c0_64, %c0_65], %250 {strides = array<i32>} : memref<8x32xf32, #tpu.memory_space<vmem>>, vector<8x32xf32>,
    %c0_66 = arith.constant 0 : index
    %c0_67 = arith.constant 0 : index
    %257 = vector.load %arg7[%c0_66, %c0_67] : memref<8x32xf32, #tpu.memory_space<vmem>>, vector<8x32xf32>
    tpu.vector_store %arg7[%c0_66, %c0_67], %249 {strides = array<i32>} : memref<8x32xf32, #tpu.memory_space<vmem>>, vector<8x32xf32>,
    %c0_68 = arith.constant 0 : index
    %c0_69 = arith.constant 0 : index
    %258 = vector.load %arg8[%c0_68, %c0_69] : memref<8x32xf32, #tpu.memory_space<vmem>>, vector<8x32xf32>
    tpu.vector_store %arg8[%c0_68, %c0_69], %250 {strides = array<i32>} : memref<8x32xf32, #tpu.memory_space<vmem>>, vector<8x32xf32>,
    return
  }
  func.func @transform_0(%arg0: i32, %arg1: i32) -> (i32, i32, i32) {
    %c0_i32 = arith.constant 0 : i32
    %c0_i32_0 = arith.constant 0 : i32
    return %arg1, %arg0, %c0_i32 : i32, i32, i32
  }
  func.func @transform_1(%arg0: i32, %arg1: i32) -> (i32, i32) {
    %c0_i32 = arith.constant 0 : i32
    %c0_i32_0 = arith.constant 0 : i32
    return %arg0, %c0_i32 : i32, i32
  }
  func.func @transform_2(%arg0: i32, %arg1: i32) -> (i32, i32) {
    %c0_i32 = arith.constant 0 : i32
    %c0_i32_0 = arith.constant 0 : i32
    return %arg0, %c0_i32 : i32, i32
  }
  func.func @transform_4(%arg0: i32, %arg1: i32) -> (i32, i32, i32) {
    %c0_i32 = arith.constant 0 : i32
    %c0_i32_0 = arith.constant 0 : i32
    return %arg1, %arg0, %c0_i32 : i32, i32, i32
  }
  func.func @transform_5(%arg0: i32, %arg1: i32) -> (i32, i32) {
    %c0_i32 = arith.constant 0 : i32
    %c0_i32_0 = arith.constant 0 : i32
    return %arg0, %c0_i32 : i32, i32
  }
  func.func @transform_6(%arg0: i32, %arg1: i32) -> (i32, i32) {
    %c0_i32 = arith.constant 0 : i32
    %c0_i32_0 = arith.constant 0 : i32
    return %arg0, %c0_i32 : i32, i32
  }
}

</mosaic_0001>

<llo_original>
// kernel: lstm_forward.2
$region0: #{lstm_forward.2}
  #allocation0 [shape = 'u32[]', space=smem, size = 0x4, offset = 0x4, fixed_abs, tag = 'smem constant byte address 0x4 - core index']
  #allocation1 [shape = 'u32[144,128]{1,0:T(1,128)}', space=vmem, size = 0x12000, scoped, tag = 'internal scratch']
  #allocation2 [shape = 'bf16[32,128]{1,0:T(16,128)(2,1)}', space=vmem, size = 0x2000, scoped, tag = 'scratch operand']
  #allocation3 [shape = 's32[1]{0}', space=sflag, size = 0x4, scoped, tag = 'scratch operand']
  #allocation4 [shape = 'f32[8,32]{1,0:T(8,128)}', space=vmem, size = 0x1000, scoped, tag = 'scratch operand']
  #allocation5 [shape = 'f32[8,32]{1,0:T(8,128)}', space=vmem, size = 0x1000, scoped, tag = 'scratch operand']
  #allocation8 [shape = 's32[]', space=sflag, size = 0x4, offset = 0, fixed_abs, tag = 'sflag constant byte address 0x0 - dummy sync flag']
  %s0 = inlined_call_operand.vmem [shape: bf16[24,16,128], index: 0, kind: input, shape index: {}]
  %s1 = inlined_call_operand.vmem [shape: f32[16,32], index: 1, kind: input, shape index: {}]
  %s2 = inlined_call_operand.vmem [shape: f32[16,32], index: 2, kind: input, shape index: {}]
  %s3 = inlined_call_operand.vmem [shape: bf16[32,128], index: 3, kind: input, shape index: {}]
  %s4 = inlined_call_operand.vmem [shape: f32[24,16,32], index: 4, kind: output, shape index: {0}]
  %s5 = inlined_call_operand.vmem [shape: f32[16,32], index: 5, kind: output, shape index: {1}]
  %s6 = inlined_call_operand.vmem [shape: f32[16,32], index: 6, kind: output, shape index: {2}]
  %7 = xla_tuple %s4, %s5, %s6
  %s8 = sld [smem:[#allocation0]]
  $region174: #{lstm_forward.2} parent=0
    _
  %s10 = ssub.s32 1, %s8
  %s11 = scalar_select 0, %s10, %s8
  $region1: #{lstm_forward.2} parent=0
    #allocation6 [shape = 'u8[32768]{0}', space=vmem, size = 0x8000, scoped, tag = 'input window, operand 0']
    #allocation7 [shape = 'u8[65536]{0}', space=vmem, size = 0x10000, scoped, tag = 'output window, operand 0']
    loop: start=0, step=1, limit=8
    $region2: #{lstm_forward.2} parent=1 // loop_pre_header
      _
    $region3: #{lstm_forward.2} parent=1 // loop_header
      %s13 = sphi 0, %s17
      %p14 = scmp.ge.s32.totalorder %s13, 8
      %s20 = sphi 0, %s32
      %s21 = sphi 0, %s28
      %s22 = sphi 0, %s20
      %s23 = sphi 0, %s21
      %s24 = sphi 0, %s22
      %s25 = sphi 0, %s23
      %s37 = sphi 0, %s39
      %s40 = sphi 0, %s37
      %s41 = sphi 0, %s40
      %s57 = sphi 0, %s41
      %s63 = sphi 0, %s65
      %s66 = sphi 0, %s63
      %s67 = sphi 0, %s66
      %s83 = sphi 0, %s67
      %s89 = sphi 0, %s91
      %s92 = sphi 0, %s89
      %s93 = sphi 0, %s92
      %s109 = sphi 0, %s93
      %s117 = sphi 0, %s119
      %s120 = sphi 0, %s117
      %s121 = sphi 0, %s120
      %s137 = sphi 0, %s121
      %s143 = sphi 0, %s145
      %s146 = sphi 0, %s143
      %s147 = sphi 0, %s146
      %s163 = sphi 0, %s147
      %s169 = sphi 0, %s171
      %s172 = sphi 0, %s169
      %s173 = sphi 0, %s172
      %s189 = sphi 0, %s173
    $region4: #{lstm_forward.2} parent=1 // loop_header_branch
      %16 = sbr.rel (%p14) target = $region8
    $region5: #{lstm_forward.2} parent=1 // loop_body
      %s18 = ssub.s32 %s13, 1
      %s19 = ssub.s32 %s13, 2
      %s26 = sadd.s32 1, %s21
      %p27 = scmp.ge.s32.totalorder %s26, 3
      %s28 = scalar_select %p27, 0, %s26
      %s29 = sadd.s32 1, %s20
      %s30 = scalar_select %p27, %s29, %s20
      %p31 = scmp.ge.s32.totalorder %s30, 2
      %s32 = scalar_select %p31, 0, %s30
      %s33 = ssub.s32 %s21, %s28
      %s34 = ssub.s32 %s20, %s32
      %s35 = sor.u32 %s33, %s34
      %p36 = scmp.eq.s32.totalorder %s35, 0
      %s38 = sadd.s32 %s37, 1
      %s39 = scalar_select %p36, %s37, %s38
      %p42 = pneg %p36
      %p43 = scmp.eq.s32.totalorder %s13, 5
      %p44 = por %p42, %p43
      %p45 = scmp.ne.s32.totalorder %s37, %s40
      %p46 = scmp.eq.s32.totalorder %s13, 0
      %p47 = por %p45, %p46
      %p48 = scmp.ne.s32.totalorder %s37, %s40
      %p49 = scmp.eq.s32.totalorder %s18, 5
      %p50 = por %p48, %p49
      %p51 = scmp.ne.s32.totalorder %s40, %s41
      %p52 = scmp.eq.s32.totalorder %s18, 0
      %p53 = por %p51, %p52
      %p54 = scmp.ne.s32.totalorder %s40, %s41
      %p55 = scmp.eq.s32.totalorder %s19, 5
      %p56 = por %p54, %p55
      %p58 = scmp.ne.s32.totalorder %s41, %s57
      %p59 = scmp.eq.s32.totalorder %s19, 0
      %p60 = por %p58, %p59
      %s61 = ssub.s32 %s20, %s32
      %p62 = scmp.eq.s32.totalorder %s61, 0
      %s64 = sadd.s32 %s63, 1
      %s65 = scalar_select %p62, %s63, %s64
      %p68 = pneg %p62
      %p69 = scmp.eq.s32.totalorder %s13, 5
      %p70 = por %p68, %p69
      %p71 = scmp.ne.s32.totalorder %s63, %s66
      %p72 = scmp.eq.s32.totalorder %s13, 0
      %p73 = por %p71, %p72
      %p74 = scmp.ne.s32.totalorder %s63, %s66
      %p75 = scmp.eq.s32.totalorder %s18, 5
      %p76 = por %p74, %p75
      %p77 = scmp.ne.s32.totalorder %s66, %s67
      %p78 = scmp.eq.s32.totalorder %s18, 0
      %p79 = por %p77, %p78
      %p80 = scmp.ne.s32.totalorder %s66, %s67
      %p81 = scmp.eq.s32.totalorder %s19, 5
      %p82 = por %p80, %p81
      %p84 = scmp.ne.s32.totalorder %s67, %s83
      %p85 = scmp.eq.s32.totalorder %s19, 0
      %p86 = por %p84, %p85
      %s87 = ssub.s32 %s20, %s32
      %p88 = scmp.eq.s32.totalorder %s87, 0
      %s90 = sadd.s32 %s89, 1
      %s91 = scalar_select %p88, %s89, %s90
      %p94 = pneg %p88
      %p95 = scmp.eq.s32.totalorder %s13, 5
      %p96 = por %p94, %p95
      %p97 = scmp.ne.s32.totalorder %s89, %s92
      %p98 = scmp.eq.s32.totalorder %s13, 0
      %p99 = por %p97, %p98
      %p100 = scmp.ne.s32.totalorder %s89, %s92
      %p101 = scmp.eq.s32.totalorder %s18, 5
      %p102 = por %p100, %p101
      %p103 = scmp.ne.s32.totalorder %s92, %s93
      %p104 = scmp.eq.s32.totalorder %s18, 0
      %p105 = por %p103, %p104
      %p106 = scmp.ne.s32.totalorder %s92, %s93
      %p107 = scmp.eq.s32.totalorder %s19, 5
      %p108 = por %p106, %p107
      %p110 = scmp.ne.s32.totalorder %s93, %s109
      %p111 = scmp.eq.s32.totalorder %s19, 0
      %p112 = por %p110, %p111
      %s113 = ssub.s32 %s21, %s28
      %s114 = ssub.s32 %s20, %s32
      %s115 = sor.u32 %s113, %s114
      %p116 = scmp.eq.s32.totalorder %s115, 0
      %s118 = sadd.s32 %s117, 1
      %s119 = scalar_select %p116, %s117, %s118
      %p122 = pneg %p116
      %p123 = scmp.eq.s32.totalorder %s13, 5
      %p124 = por %p122, %p123
      %p125 = scmp.ne.s32.totalorder %s117, %s120
      %p126 = scmp.eq.s32.totalorder %s13, 0
      %p127 = por %p125, %p126
      %p128 = scmp.ne.s32.totalorder %s117, %s120
      %p129 = scmp.eq.s32.totalorder %s18, 5
      %p130 = por %p128, %p129
      %p131 = scmp.ne.s32.totalorder %s120, %s121
      %p132 = scmp.eq.s32.totalorder %s18, 0
      %p133 = por %p131, %p132
      %p134 = scmp.ne.s32.totalorder %s120, %s121
      %p135 = scmp.eq.s32.totalorder %s19, 5
      %p136 = por %p134, %p135
      %p138 = scmp.ne.s32.totalorder %s121, %s137
      %p139 = scmp.eq.s32.totalorder %s19, 0
      %p140 = por %p138, %p139
      %s141 = ssub.s32 %s20, %s32
      %p142 = scmp.eq.s32.totalorder %s141, 0
      %s144 = sadd.s32 %s143, 1
      %s145 = scalar_select %p142, %s143, %s144
      %p148 = pneg %p142
      %p149 = scmp.eq.s32.totalorder %s13, 5
      %p150 = por %p148, %p149
      %p151 = scmp.ne.s32.totalorder %s143, %s146
      %p152 = scmp.eq.s32.totalorder %s13, 0
      %p153 = por %p151, %p152
      %p154 = scmp.ne.s32.totalorder %s143, %s146
      %p155 = scmp.eq.s32.totalorder %s18, 5
      %p156 = por %p154, %p155
      %p157 = scmp.ne.s32.totalorder %s146, %s147
      %p158 = scmp.eq.s32.totalorder %s18, 0
      %p159 = por %p157, %p158
      %p160 = scmp.ne.s32.totalorder %s146, %s147
      %p161 = scmp.eq.s32.totalorder %s19, 5
      %p162 = por %p160, %p161
      %p164 = scmp.ne.s32.totalorder %s147, %s163
      %p165 = scmp.eq.s32.totalorder %s19, 0
      %p166 = por %p164, %p165
      %s167 = ssub.s32 %s20, %s32
      %p168 = scmp.eq.s32.totalorder %s167, 0
      %s170 = sadd.s32 %s169, 1
      %s171 = scalar_select %p168, %s169, %s170
      %p174 = pneg %p168
      %p175 = scmp.eq.s32.totalorder %s13, 5
      %p176 = por %p174, %p175
      %p177 = scmp.ne.s32.totalorder %s169, %s172
      %p178 = scmp.eq.s32.totalorder %s13, 0
      %p179 = por %p177, %p178
      %p180 = scmp.ne.s32.totalorder %s169, %s172
      %p181 = scmp.eq.s32.totalorder %s18, 5
      %p182 = por %p180, %p181
      %p183 = scmp.ne.s32.totalorder %s172, %s173
      %p184 = scmp.eq.s32.totalorder %s18, 0
      %p185 = por %p183, %p184
      %p186 = scmp.ne.s32.totalorder %s172, %s173
      %p187 = scmp.eq.s32.totalorder %s19, 5
      %p188 = por %p186, %p187
      %p190 = scmp.ne.s32.totalorder %s173, %s189
      %p191 = scmp.eq.s32.totalorder %s19, 0
      %p192 = por %p190, %p191
      %p193 = scmp.le.s32.totalorder 1, %s13
      %p194 = scmp.lt.s32.totalorder %s13, 7
      %p195 = pnand %p193, %p194
      %p196 = pneg %p195
      // Predicated region
      $region9: #{lstm_forward.2} parent=5 // pred_check
        _
      $region10: #{lstm_forward.2} parent=5 // pred_check_branch
        %198 = sbr.rel (%p195) target = $region12
      $region11: #{lstm_forward.2} parent=5 // pred_region
        %s199 = ssub.s32 %s13, 1
      $region12: #{lstm_forward.2} parent=5 // pred_fallthru
        _
      %p200 = scmp.lt.s32.totalorder %s13, 6
      // Predicated region
      $region13: #{lstm_forward.2} parent=5 // pred_check
        %p201 = pneg %p200
      $region14: #{lstm_forward.2} parent=5 // pred_check_branch
        %203 = sbr.rel (%p201) target = $region16
      $region15: #{lstm_forward.2} parent=5 // pred_region
        // Predicated region
        $region17: #{lstm_forward.2} parent=15 // pred_check
          %p204 = pneg %p47
        $region18: #{lstm_forward.2} parent=15 // pred_check_branch
          %206 = sbr.rel (%p204) target = $region20
        $region19: #{lstm_forward.2} parent=15 // pred_region
          %s207 = sand.u32 %s37, 1
          %s208 = sand.u32 %s37, 1
          %s209 = smul.addr %s208, 32
          %s210 = scalar_lea.vmem [#allocation6], %s209
          %s211 = smul.u32 8, %s21
          %s212 = smul.addr %s211, 2
          %s213 = sadd.s32 %s20, %s212
          %s214 = smul.addr %s213, 4
          %s215 = scalar_lea.vmem %s0, %s214
          // Predicated region
          $region21: #{lstm_forward.2} parent=19 // pred_check
            _
          $region22: #{lstm_forward.2} parent=19 // pred_check_branch
            %217 = sbr.rel (0) target = $region24
          $region23: #{lstm_forward.2} parent=19 // pred_region
            // Predicated region
            $region25: #{lstm_forward.2} parent=23 // pred_check
              _
            $region26: #{lstm_forward.2} parent=23 // pred_check_branch
              %219 = sbr.rel target = $region28
            $region27: #{lstm_forward.2} parent=23 // pred_region
              // Predicated region
              $region40: #{lstm_forward.2} parent=27 // pred_check
                _
              $region41: #{lstm_forward.2} parent=27 // pred_check_branch
                %248 = sbr.rel (0) target = $region43
              $region42: #{lstm_forward.2} parent=27 // pred_region
                loop: start=0, step=1, limit=1
                $region44: #{lstm_forward.2} parent=42 // loop_pre_header
                  _
                $region45: #{lstm_forward.2} parent=42 // loop_header
                  %s250 = sphi 0, %s254
                  %p251 = scmp.ge.s32.totalorder %s250, 1
                  %s255 = sphi %s215, %s215
                  %s256 = sphi %s210, %s210
                $region46: #{lstm_forward.2} parent=42 // loop_header_branch
                  %253 = sbr.rel (%p251) target = $region50
                $region47: #{lstm_forward.2} parent=42 // loop_body
                  _
                $region48: #{lstm_forward.2} parent=42 // loop_footer
                  %s254 = sadd.s32 1, %s250
                $region49: #{lstm_forward.2} parent=42 // loop_footer_branch
                  %249 = sbr.rel target = $region45
                $region50: #{lstm_forward.2} parent=42 // loop_exit
                  _
                loop: start=0, step=1, limit=1
                $region51: #{lstm_forward.2} parent=42 // loop_pre_header
                  _
                $region52: #{lstm_forward.2} parent=42 // loop_header
                  %s259 = sphi 0, %s263
                  %p260 = scmp.ge.s32.totalorder %s259, 1
                  %s264 = sphi %s215, %s215
                  %s265 = sphi %s210, %s210
                $region53: #{lstm_forward.2} parent=42 // loop_header_branch
                  %262 = sbr.rel (%p260) target = $region57
                $region54: #{lstm_forward.2} parent=42 // loop_body
                  %v266 = vld [vmem:[%s264] sm:$0xf]
                  %267 = vst [vmem:[%s265] sm:$0xf] %v266
                  %v268 = vld [vmem:[%s264 + $0x8] sm:$0xf]
                  %269 = vst [vmem:[%s265 + $0x4] sm:$0xf] %v268
                  %v270 = vld [vmem:[%s264 + $0x10] sm:$0xf]
                  %271 = vst [vmem:[%s265 + $0x8] sm:$0xf] %v270
                  %v272 = vld [vmem:[%s264 + $0x18] sm:$0xf]
                  %273 = vst [vmem:[%s265 + $0xc] sm:$0xf] %v272
                  %v274 = vld [vmem:[%s264 + $0x20] sm:$0xf]
                  %275 = vst [vmem:[%s265 + $0x10] sm:$0xf] %v274
                  %v276 = vld [vmem:[%s264 + $0x28] sm:$0xf]
                  %277 = vst [vmem:[%s265 + $0x14] sm:$0xf] %v276
                  %v278 = vld [vmem:[%s264 + $0x30] sm:$0xf]
                  %279 = vst [vmem:[%s265 + $0x18] sm:$0xf] %v278
                  %v280 = vld [vmem:[%s264 + $0x38] sm:$0xf]
                  %281 = vst [vmem:[%s265 + $0x1c] sm:$0xf] %v280
                $region55: #{lstm_forward.2} parent=42 // loop_footer
                  %s263 = sadd.s32 1, %s259
                $region56: #{lstm_forward.2} parent=42 // loop_footer_branch
                  %258 = sbr.rel target = $region52
                $region57: #{lstm_forward.2} parent=42 // loop_exit
                  _
              $region43: #{lstm_forward.2} parent=27 // pred_fallthru
                _
            $region28: #{lstm_forward.2} parent=23 // pred_fallthru
              _
            // Predicated region
            $region29: #{lstm_forward.2} parent=23 // pred_check
              _
            $region30: #{lstm_forward.2} parent=23 // pred_check_branch
              %221 = sbr.rel (0) target = $region32
            $region31: #{lstm_forward.2} parent=23 // pred_region
              loop: start=0, step=1, limit=1
              $region33: #{lstm_forward.2} parent=31 // loop_pre_header
                _
              $region34: #{lstm_forward.2} parent=31 // loop_header
                %s224 = sphi 0, %s228
                %p225 = scmp.ge.s32.totalorder %s224, 1
                %s229 = sphi %s215, %s215
                %s230 = sphi %s210, %s210
              $region35: #{lstm_forward.2} parent=31 // loop_header_branch
                %227 = sbr.rel (%p225) target = $region39
              $region36: #{lstm_forward.2} parent=31 // loop_body
                %v231 = vld [vmem:[%s229] sm:$0xf]
                %232 = vst [vmem:[%s230] sm:$0xf] %v231
                %v233 = vld [vmem:[%s229 + $0x8] sm:$0xf]
                %234 = vst [vmem:[%s230 + $0x4] sm:$0xf] %v233
                %v235 = vld [vmem:[%s229 + $0x10] sm:$0xf]
                %236 = vst [vmem:[%s230 + $0x8] sm:$0xf] %v235
                %v237 = vld [vmem:[%s229 + $0x18] sm:$0xf]
                %238 = vst [vmem:[%s230 + $0xc] sm:$0xf] %v237
                %v239 = vld [vmem:[%s229 + $0x20] sm:$0xf]
                %240 = vst [vmem:[%s230 + $0x10] sm:$0xf] %v239
                %v241 = vld [vmem:[%s229 + $0x28] sm:$0xf]
                %242 = vst [vmem:[%s230 + $0x14] sm:$0xf] %v241
                %v243 = vld [vmem:[%s229 + $0x30] sm:$0xf]
                %244 = vst [vmem:[%s230 + $0x18] sm:$0xf] %v243
                %v245 = vld [vmem:[%s229 + $0x38] sm:$0xf]
                %246 = vst [vmem:[%s230 + $0x1c] sm:$0xf] %v245
              $region37: #{lstm_forward.2} parent=31 // loop_footer
                %s228 = sadd.s32 1, %s224
              $region38: #{lstm_forward.2} parent=31 // loop_footer_branch
                %223 = sbr.rel target = $region34
              $region39: #{lstm_forward.2} parent=31 // loop_exit
                _
            $region32: #{lstm_forward.2} parent=23 // pred_fallthru
              _
          $region24: #{lstm_forward.2} parent=19 // pred_fallthru
            _
          %282 = vnop
        $region20: #{lstm_forward.2} parent=15 // pred_fallthru
          _
        // Predicated region
        $region58: #{lstm_forward.2} parent=15 // pred_check
          %p283 = pneg %p73
        $region59: #{lstm_forward.2} parent=15 // pred_check_branch
          %285 = sbr.rel (%p283) target = $region61
        $region60: #{lstm_forward.2} parent=15 // pred_region
          %p286 = scmp.lt.s32.totalorder %s20, 1
          %s287 = scalar_select %p286, %s20, 1
          %s288 = smul.addr %s287, 8
          %s289 = scalar_lea.vmem %s1, %s288
        $region61: #{lstm_forward.2} parent=15 // pred_fallthru
          _
        // Predicated region
        $region62: #{lstm_forward.2} parent=15 // pred_check
          %p290 = pneg %p99
        $region63: #{lstm_forward.2} parent=15 // pred_check_branch
          %292 = sbr.rel (%p290) target = $region65
        $region64: #{lstm_forward.2} parent=15 // pred_region
          %p293 = scmp.lt.s32.totalorder %s20, 1
          %s294 = scalar_select %p293, %s20, 1
          %s295 = smul.addr %s294, 8
          %s296 = scalar_lea.vmem %s2, %s295
        $region65: #{lstm_forward.2} parent=15 // pred_fallthru
          _
      $region16: #{lstm_forward.2} parent=5 // pred_fallthru
        _
      %p297 = scmp.le.s32.totalorder 1, %s13
      %p298 = scmp.lt.s32.totalorder %s13, 7
      %p299 = pnand %p297, %p298
      %p300 = pneg %p299
      // Predicated region
      $region66: #{lstm_forward.2} parent=5 // pred_check
        _
      $region67: #{lstm_forward.2} parent=5 // pred_check_branch
        %302 = sbr.rel (%p299) target = $region69
      $region68: #{lstm_forward.2} parent=5 // pred_region
        %s303 = ssub.s32 %s13, 1
        %s304 = sand.u32 %s40, 1
        %s305 = sand.u32 %s40, 1
        %s306 = smul.addr %s305, 32
        %s307 = scalar_lea.vmem [#allocation6], %s306
        // Predicated region
        $region70: #{lstm_forward.2} parent=68 // pred_check
          %p308 = pneg %p53
        $region71: #{lstm_forward.2} parent=68 // pred_check_branch
          %310 = sbr.rel (%p308) target = $region73
        $region72: #{lstm_forward.2} parent=68 // pred_region
          _
        $region73: #{lstm_forward.2} parent=68 // pred_fallthru
          _
        %s311 = sand.u32 %s40, 1
        %s312 = sand.u32 %s40, 1
        %s313 = smul.addr %s312, 32
        %s314 = scalar_lea.vmem [#allocation6], %s313
        %p315 = pneg %p53
        %p316 = pneg %p50
        %p317 = scmp.lt.s32.totalorder %s22, 1
        %s318 = scalar_select %p317, %s22, 1
        %s319 = smul.addr %s318, 8
        %s320 = scalar_lea.vmem %s1, %s319
        %p321 = pneg %p79
        %p322 = pneg %p76
        %p323 = scmp.lt.s32.totalorder %s22, 1
        %s324 = scalar_select %p323, %s22, 1
        %s325 = smul.addr %s324, 8
        %s326 = scalar_lea.vmem %s2, %s325
        %p327 = pneg %p105
        %p328 = pneg %p102
        %p329 = pneg %p133
        %p330 = pneg %p130
        %s331 = sand.u32 %s120, 1
        %s332 = sand.u32 %s120, 1
        %s333 = smul.addr %s332, 64
        %s334 = scalar_lea.vmem [#allocation7], %s333
        %p335 = pneg %p159
        %p336 = pneg %p156
        %p337 = scmp.lt.s32.totalorder %s22, 1
        %s338 = scalar_select %p337, %s22, 1
        %s339 = smul.addr %s338, 8
        %s340 = scalar_lea.vmem %s5, %s339
        %p341 = pneg %p185
        %p342 = pneg %p182
        %p343 = scmp.lt.s32.totalorder %s22, 1
        %s344 = scalar_select %p343, %s22, 1
        %s345 = smul.addr %s344, 8
        %s346 = scalar_lea.vmem %s6, %s345
        %s347 = smul.u32 8, %s23
        %p348 = scmp.lt.s32.totalorder %s22, 1
        %s349 = scalar_select %p348, %s22, 1
        %s350 = smul.addr %s349, 8
        %s351 = scalar_lea.vmem %s1, %s350
        %p352 = scmp.lt.s32.totalorder %s22, 1
        %s353 = scalar_select %p352, %s22, 1
        %s354 = smul.addr %s353, 8
        %s355 = scalar_lea.vmem %s2, %s354
        %s356 = smul.u32 8, %s23
        %p357 = scmp.lt.s32.totalorder %s22, 1
        %s358 = scalar_select %p357, %s22, 1
        %s359 = smul.addr %s358, 8
        %s360 = scalar_lea.vmem %s5, %s359
        %p361 = scmp.lt.s32.totalorder %s22, 1
        %s362 = scalar_select %p361, %s22, 1
        %s363 = smul.addr %s362, 8
        %s364 = scalar_lea.vmem %s6, %s363
        %p366 = scmp.eq.s32.totalorder %s23, 0
        // Predicated region
        $region74: #{lstm_forward.2} parent=68 // pred_check
          %p367 = pneg %p366
        $region75: #{lstm_forward.2} parent=68 // pred_check_branch
          %369 = sbr.rel (%p367) target = $region77
        $region76: #{lstm_forward.2} parent=68 // pred_region
          %p371 = scmp.lt.u32.totalorder 16, 8
          %p372 = pneg %p371
          // Predicated region
          $region78: #{lstm_forward.2} parent=76 // pred_check
            _
          $region79: #{lstm_forward.2} parent=76 // pred_check_branch
            %374 = sbr.rel (%p371) target = $region81
          $region80: #{lstm_forward.2} parent=76 // pred_region
            %s389 = sand.u32 16, 7
            %p390 = scmp.eq.s32.totalorder %s389, 0
            // Predicated region
            $region93: #{lstm_forward.2} parent=80 // pred_check
              %p391 = pneg %p390
            $region94: #{lstm_forward.2} parent=80 // pred_check_branch
              %393 = sbr.rel (%p391) target = $region96
            $region95: #{lstm_forward.2} parent=80 // pred_region
              loop: start=0, step=1, limit=1
              $region97: #{lstm_forward.2} parent=95 // loop_pre_header
                _
              $region98: #{lstm_forward.2} parent=95 // loop_header
                %s395 = sphi 0, %s399
                %p396 = scmp.ge.s32.totalorder %s395, 1
                %s400 = sphi %s3, %s3
                %s401 = sphi [#allocation2], [#allocation2]
              $region99: #{lstm_forward.2} parent=95 // loop_header_branch
                %398 = sbr.rel (%p396) target = $region103
              $region100: #{lstm_forward.2} parent=95 // loop_body
                %v402 = vld [vmem:[%s400] sm:$0xff]
                %403 = vst [vmem:[%s401] sm:$0xff] %v402
                %v404 = vld [vmem:[%s400 + $0x8] sm:$0xff]
                %405 = vst [vmem:[%s401 + $0x8] sm:$0xff] %v404
              $region101: #{lstm_forward.2} parent=95 // loop_footer
                %s399 = sadd.s32 1, %s395
              $region102: #{lstm_forward.2} parent=95 // loop_footer_branch
                %394 = sbr.rel target = $region98
              $region103: #{lstm_forward.2} parent=95 // loop_exit
                _
            $region96: #{lstm_forward.2} parent=80 // pred_fallthru
              _
            %p406 = pneg %p390
            // Predicated region
            $region104: #{lstm_forward.2} parent=80 // pred_check
              _
            $region105: #{lstm_forward.2} parent=80 // pred_check_branch
              %408 = sbr.rel (%p390) target = $region107
            $region106: #{lstm_forward.2} parent=80 // pred_region
              %s409 = sand.u32 16, 7
            $region107: #{lstm_forward.2} parent=80 // pred_fallthru
              _
          $region81: #{lstm_forward.2} parent=76 // pred_fallthru
            _
          // Predicated region
          $region82: #{lstm_forward.2} parent=76 // pred_check
            %p375 = pneg %p371
          $region83: #{lstm_forward.2} parent=76 // pred_check_branch
            %377 = sbr.rel (%p375) target = $region85
          $region84: #{lstm_forward.2} parent=76 // pred_region
            %s378 = sshllo.u32 0, 16
            loop: start=0, step=1, limit=1
            $region86: #{lstm_forward.2} parent=84 // loop_pre_header
              _
            $region87: #{lstm_forward.2} parent=84 // loop_header
              %s380 = sphi 0, %s384
              %p381 = scmp.ge.s32.totalorder %s380, 1
              %s385 = sphi %s3, %s3
              %s386 = sphi [#allocation2], [#allocation2]
            $region88: #{lstm_forward.2} parent=84 // loop_header_branch
              %383 = sbr.rel (%p381) target = $region92
            $region89: #{lstm_forward.2} parent=84 // loop_body
              %v387 = vld [vmem:[%s385] sm:%s378]
              %388 = vst [vmem:[%s386] sm:%s378] %v387
            $region90: #{lstm_forward.2} parent=84 // loop_footer
              %s384 = sadd.s32 1, %s380
            $region91: #{lstm_forward.2} parent=84 // loop_footer_branch
              %379 = sbr.rel target = $region87
            $region92: #{lstm_forward.2} parent=84 // loop_exit
              _
          $region85: #{lstm_forward.2} parent=76 // pred_fallthru
            _
          // Predicated region
          $region108: #{lstm_forward.2} parent=76 // pred_check
            _
          $region109: #{lstm_forward.2} parent=76 // pred_check_branch
            %412 = sbr.rel (0) target = $region111
          $region110: #{lstm_forward.2} parent=76 // pred_region
            %413 = vsyncadd [#allocation3], 256
          $region111: #{lstm_forward.2} parent=76 // pred_fallthru
            _
          %v414 = vld [vmem:[%s351] sm:$0xff]
          %vm415 = vcmask 261120
          %416 = vst.msk [vmem:[#allocation4] sm:$0xff] %vm415, %v414
          %v417 = vld [vmem:[%s355] sm:$0xff]
          %418 = vst.msk [vmem:[#allocation5] sm:$0xff] %vm415, %v417
          %s419 = smul.u32 4, 4
          %s420 = smul.u32 %s419, 1
          %s421 = sshll.u32 %s420, 4
          %422 = dma.done [#allocation3], %s421
        $region77: #{lstm_forward.2} parent=68 // pred_fallthru
          _
        %v423 = vld [vmem:[#allocation2] sm:$0xff]
        %v424 = vld [vmem:[#allocation2 + $0x8] sm:$0xff]
        %s425 = smul.u32 %s23, 8
        %v426 = vld [vmem:[#allocation4] sm:$0xff]
        %v427 = vld [vmem:[#allocation5] sm:$0xff]
        %v428 = vld [vmem:[%s307] sm:$0xf]
        %v429 = vunpack.c.l.bf16 %v428
        %v430 = vpack.c.bf16 %v426, %v426
        %vm431 = vcmask 261120
        %v433 = vsel %vm431, %v430, 0
        %435 = vmatprep.subr.bf16.mxu0 0
        %436 = vmatpush1.bf16.msra.mxu0 %v423
        %437 = vmatprep.subr.bf16.mxu0 0
        %438 = vmatpush1.bf16.msra.mxu0 %v424
        %439 = vmatprep.subr.bf16.mxu0 0
        %440 = vmatpush1.bf16.msra.mxu0 0
        %441 = vmatprep.subr.bf16.mxu0 0
        %442 = vmatpush1.bf16.msra.mxu0 0
        %443 = vmatprep.subr.bf16.mxu0 0
        %444 = vmatpush1.bf16.msra.mxu0 0
        %445 = vmatprep.subr.bf16.mxu0 0
        %446 = vmatpush1.bf16.msra.mxu0 0
        %447 = vmatprep.subr.bf16.mxu0 0
        %448 = vmatpush1.bf16.msra.mxu0 0
        %449 = vmatprep.subr.bf16.mxu0 0
        %450 = vmatpush1.bf16.msra.mxu0 0
        %451 = vmatprep.subr.bf16.mxu0 0
        %452 = vmatpush1.bf16.msra.mxu0 0
        %453 = vmatprep.subr.bf16.mxu0 0
        %454 = vmatpush1.bf16.msra.mxu0 0
        %455 = vmatprep.subr.bf16.mxu0 0
        %456 = vmatpush1.bf16.msra.mxu0 0
        %457 = vmatprep.subr.bf16.mxu0 0
        %458 = vmatpush1.bf16.msra.mxu0 0
        %459 = vmatprep.subr.bf16.mxu0 0
        %460 = vmatpush1.bf16.msra.mxu0 0
        %461 = vmatprep.subr.bf16.mxu0 0
        %462 = vmatpush1.bf16.msra.mxu0 0
        %463 = vmatprep.subr.bf16.mxu0 0
        %464 = vmatpush1.bf16.msra.mxu0 0
        %465 = vmatprep.subr.bf16.mxu0 0
        %466 = vmatpush1.bf16.msra.mxu0 0
        %467 = vmatprep.mubr.bf16.mxu0 0
        %468 = vmatmul.mubr.bf16.gmra.mrb[0].mxu0 %v433
        %v469 = vpop.f32.mrb[0].mxu0
        %v470 = vadd.f32 0.0, %v469
        %v471 = vpop.f32.mrb[0].mxu0
        %v472 = vpop.f32.mrb[0].mxu0
        %v473 = vpop.f32.mrb[0].mxu0
        %474 = vdwg.mxu0
        %v475 = vadd.f32 %v429, %v470
        %v476 = vxor.u32 %v475, 2147483648
        %v477 = vmul.f32 %v476, 1.442695
        %v478 = vpow.pop %v477
        %v479 = vadd.f32 %v478, 1.0
        %v480 = vrcp.pop %v479
        %v481 = vmul.f32 1.0, %v480
        %v482 = vtanh.pop %v475
        %484 = vrot.lane.b32.xlu0 %v427, 32
        %v485 = vpop.permute.xlu0 %484
        %v487 = vmul.f32 %v481, %v485
        %489 = vrot.lane.b32.xlu0 %v482, 32
        %v490 = vpop.permute.xlu0 %489
        %v492 = vmul.f32 %v481, %v490
        %494 = vrot.lane.b32.xlu0 %v492, 32
        %v495 = vpop.permute.xlu0 %494
        %v497 = vadd.f32 %v487, %v495
        %v498 = vtanh.pop %v497
        %500 = vrot.lane.b32.xlu0 %v498, 32
        %v501 = vpop.permute.xlu0 %500
        %v503 = vmul.f32 %v481, %v501
        %p504 = scmp.lt.s32.totalorder %s425, 20
        %s505 = scalar_select %p504, 1, 0
        %v506 = vstv %s505
        %vm507 = vcmp.eq.s32.totalorder %v506, 1
        %509 = vrot.lane.b32.xlu0 %v426, 64
        %v510 = vpop.permute.xlu0 %509
        %v512 = vsel %vm507, %v503, %v510
        %v513 = vsel %vm507, %v497, %v485
        %515 = vrot.lane.b32.xlu0 %v512, 64
        %v516 = vpop.permute.xlu0 %515
        %518 = vst.msk [vmem:[%s334] sm:$0xff] %vm431, %v516
        %s519 = scalar_lea.vmem %s307, 4 [#allocation6]
        %v520 = vld [vmem:[%s519] sm:$0xf]
        %v521 = vunpack.c.l.bf16 %v520
        %v522 = vpack.c.bf16 %v512, %v512
        %524 = vrot.lane.b32.xlu0 %v522, 64
        %v525 = vpop.permute.xlu0 %524
        %v527 = vsel %vm431, %v525, 0
        %529 = vmatprep.subr.bf16.mxu0 0
        %530 = vmatpush1.bf16.msra.mxu0 %v423
        %531 = vmatprep.subr.bf16.mxu0 0
        %532 = vmatpush1.bf16.msra.mxu0 %v424
        %533 = vmatprep.subr.bf16.mxu0 0
        %534 = vmatpush1.bf16.msra.mxu0 0
        %535 = vmatprep.subr.bf16.mxu0 0
        %536 = vmatpush1.bf16.msra.mxu0 0
        %537 = vmatprep.subr.bf16.mxu0 0
        %538 = vmatpush1.bf16.msra.mxu0 0
        %539 = vmatprep.subr.bf16.mxu0 0
        %540 = vmatpush1.bf16.msra.mxu0 0
        %541 = vmatprep.subr.bf16.mxu0 0
        %542 = vmatpush1.bf16.msra.mxu0 0
        %543 = vmatprep.subr.bf16.mxu0 0
        %544 = vmatpush1.bf16.msra.mxu0 0
        %545 = vmatprep.subr.bf16.mxu0 0
        %546 = vmatpush1.bf16.msra.mxu0 0
        %547 = vmatprep.subr.bf16.mxu0 0
        %548 = vmatpush1.bf16.msra.mxu0 0
        %549 = vmatprep.subr.bf16.mxu0 0
        %550 = vmatpush1.bf16.msra.mxu0 0
        %551 = vmatprep.subr.bf16.mxu0 0
        %552 = vmatpush1.bf16.msra.mxu0 0
        %553 = vmatprep.subr.bf16.mxu0 0
        %554 = vmatpush1.bf16.msra.mxu0 0
        %555 = vmatprep.subr.bf16.mxu0 0
        %556 = vmatpush1.bf16.msra.mxu0 0
        %557 = vmatprep.subr.bf16.mxu0 0
        %558 = vmatpush1.bf16.msra.mxu0 0
        %559 = vmatprep.subr.bf16.mxu0 0
        %560 = vmatpush1.bf16.msra.mxu0 0
        %561 = vmatprep.mubr.bf16.mxu0 0
        %562 = vmatmul.mubr.bf16.gmra.mrb[0].mxu0 %v527
        %v563 = vpop.f32.mrb[0].mxu0
        %v564 = vadd.f32 0.0, %v563
        %v565 = vpop.f32.mrb[0].mxu0
        %v566 = vpop.f32.mrb[0].mxu0
        %v567 = vpop.f32.mrb[0].mxu0
        %568 = vdwg.mxu0
        %v569 = vadd.f32 %v521, %v564
        %v570 = vxor.u32 %v569, 2147483648
        %v571 = vmul.f32 %v570, 1.442695
        %v572 = vpow.pop %v571
        %v573 = vadd.f32 %v572, 1.0
        %v574 = vrcp.pop %v573
        %v575 = vmul.f32 1.0, %v574
        %v576 = vtanh.pop %v569
        %v577 = vmul.f32 %v575, %v513
        %579 = vrot.lane.b32.xlu0 %v576, 32
        %v580 = vpop.permute.xlu0 %579
        %v582 = vmul.f32 %v575, %v580
        %584 = vrot.lane.b32.xlu0 %v582, 32
        %v585 = vpop.permute.xlu0 %584
        %v587 = vadd.f32 %v577, %v585
        %v588 = vtanh.pop %v587
        %590 = vrot.lane.b32.xlu0 %v588, 32
        %v591 = vpop.permute.xlu0 %590
        %v593 = vmul.f32 %v575, %v591
        %s594 = sadd.s32 %s425, 1
        %p595 = scmp.lt.s32.totalorder %s594, 20
        %s596 = scalar_select %p595, 1, 0
        %v597 = vstv %s596
        %vm598 = vcmp.eq.s32.totalorder %v597, 1
        %v599 = vsel %vm598, %v593, %v512
        %v600 = vsel %vm598, %v587, %v513
        %602 = vrot.lane.b32.xlu0 %v599, 64
        %v603 = vpop.permute.xlu0 %602
        %s605 = scalar_lea.vmem %s334, 8 [#allocation7]
        %606 = vst.msk [vmem:[%s605] sm:$0xff] %vm431, %v603
        %s607 = scalar_lea.vmem %s307, 8 [#allocation6]
        %v608 = vld [vmem:[%s607] sm:$0xf]
        %v609 = vunpack.c.l.bf16 %v608
        %v610 = vpack.c.bf16 %v599, %v599
        %612 = vrot.lane.b32.xlu0 %v610, 64
        %v613 = vpop.permute.xlu0 %612
        %v615 = vsel %vm431, %v613, 0
        %617 = vmatprep.subr.bf16.mxu0 0
        %618 = vmatpush1.bf16.msra.mxu0 %v423
        %619 = vmatprep.subr.bf16.mxu0 0
        %620 = vmatpush1.bf16.msra.mxu0 %v424
        %621 = vmatprep.subr.bf16.mxu0 0
        %622 = vmatpush1.bf16.msra.mxu0 0
        %623 = vmatprep.subr.bf16.mxu0 0
        %624 = vmatpush1.bf16.msra.mxu0 0
        %625 = vmatprep.subr.bf16.mxu0 0
        %626 = vmatpush1.bf16.msra.mxu0 0
        %627 = vmatprep.subr.bf16.mxu0 0
        %628 = vmatpush1.bf16.msra.mxu0 0
        %629 = vmatprep.subr.bf16.mxu0 0
        %630 = vmatpush1.bf16.msra.mxu0 0
        %631 = vmatprep.subr.bf16.mxu0 0
        %632 = vmatpush1.bf16.msra.mxu0 0
        %633 = vmatprep.subr.bf16.mxu0 0
        %634 = vmatpush1.bf16.msra.mxu0 0
        %635 = vmatprep.subr.bf16.mxu0 0
        %636 = vmatpush1.bf16.msra.mxu0 0
        %637 = vmatprep.subr.bf16.mxu0 0
        %638 = vmatpush1.bf16.msra.mxu0 0
        %639 = vmatprep.subr.bf16.mxu0 0
        %640 = vmatpush1.bf16.msra.mxu0 0
        %641 = vmatprep.subr.bf16.mxu0 0
        %642 = vmatpush1.bf16.msra.mxu0 0
        %643 = vmatprep.subr.bf16.mxu0 0
        %644 = vmatpush1.bf16.msra.mxu0 0
        %645 = vmatprep.subr.bf16.mxu0 0
        %646 = vmatpush1.bf16.msra.mxu0 0
        %647 = vmatprep.subr.bf16.mxu0 0
        %648 = vmatpush1.bf16.msra.mxu0 0
        %649 = vmatprep.mubr.bf16.mxu0 0
        %650 = vmatmul.mubr.bf16.gmra.mrb[0].mxu0 %v615
        %v651 = vpop.f32.mrb[0].mxu0
        %v652 = vadd.f32 0.0, %v651
        %v653 = vpop.f32.mrb[0].mxu0
        %v654 = vpop.f32.mrb[0].mxu0
        %v655 = vpop.f32.mrb[0].mxu0
        %656 = vdwg.mxu0
        %v657 = vadd.f32 %v609, %v652
        %v658 = vxor.u32 %v657, 2147483648
        %v659 = vmul.f32 %v658, 1.442695
        %v660 = vpow.pop %v659
        %v661 = vadd.f32 %v660, 1.0
        %v662 = vrcp.pop %v661
        %v663 = vmul.f32 1.0, %v662
        %v664 = vtanh.pop %v657
        %v665 = vmul.f32 %v663, %v600
        %667 = vrot.lane.b32.xlu0 %v664, 32
        %v668 = vpop.permute.xlu0 %667
        %v670 = vmul.f32 %v663, %v668
        %672 = vrot.lane.b32.xlu0 %v670, 32
        %v673 = vpop.permute.xlu0 %672
        %v675 = vadd.f32 %v665, %v673
        %v676 = vtanh.pop %v675
        %678 = vrot.lane.b32.xlu0 %v676, 32
        %v679 = vpop.permute.xlu0 %678
        %v681 = vmul.f32 %v663, %v679
        %s682 = sadd.s32 %s425, 2
        %p683 = scmp.lt.s32.totalorder %s682, 20
        %s684 = scalar_select %p683, 1, 0
        %v685 = vstv %s684
        %vm686 = vcmp.eq.s32.totalorder %v685, 1
        %v687 = vsel %vm686, %v681, %v599
        %v688 = vsel %vm686, %v675, %v600
        %690 = vrot.lane.b32.xlu0 %v687, 64
        %v691 = vpop.permute.xlu0 %690
        %s693 = scalar_lea.vmem %s334, 16 [#allocation7]
        %694 = vst.msk [vmem:[%s693] sm:$0xff] %vm431, %v691
        %s695 = scalar_lea.vmem %s307, 12 [#allocation6]
        %v696 = vld [vmem:[%s695] sm:$0xf]
        %v697 = vunpack.c.l.bf16 %v696
        %v698 = vpack.c.bf16 %v687, %v687
        %700 = vrot.lane.b32.xlu0 %v698, 64
        %v701 = vpop.permute.xlu0 %700
        %v703 = vsel %vm431, %v701, 0
        %705 = vmatprep.subr.bf16.mxu0 0
        %706 = vmatpush1.bf16.msra.mxu0 %v423
        %707 = vmatprep.subr.bf16.mxu0 0
        %708 = vmatpush1.bf16.msra.mxu0 %v424
        %709 = vmatprep.subr.bf16.mxu0 0
        %710 = vmatpush1.bf16.msra.mxu0 0
        %711 = vmatprep.subr.bf16.mxu0 0
        %712 = vmatpush1.bf16.msra.mxu0 0
        %713 = vmatprep.subr.bf16.mxu0 0
        %714 = vmatpush1.bf16.msra.mxu0 0
        %715 = vmatprep.subr.bf16.mxu0 0
        %716 = vmatpush1.bf16.msra.mxu0 0
        %717 = vmatprep.subr.bf16.mxu0 0
        %718 = vmatpush1.bf16.msra.mxu0 0
        %719 = vmatprep.subr.bf16.mxu0 0
        %720 = vmatpush1.bf16.msra.mxu0 0
        %721 = vmatprep.subr.bf16.mxu0 0
        %722 = vmatpush1.bf16.msra.mxu0 0
        %723 = vmatprep.subr.bf16.mxu0 0
        %724 = vmatpush1.bf16.msra.mxu0 0
        %725 = vmatprep.subr.bf16.mxu0 0
        %726 = vmatpush1.bf16.msra.mxu0 0
        %727 = vmatprep.subr.bf16.mxu0 0
        %728 = vmatpush1.bf16.msra.mxu0 0
        %729 = vmatprep.subr.bf16.mxu0 0
        %730 = vmatpush1.bf16.msra.mxu0 0
        %731 = vmatprep.subr.bf16.mxu0 0
        %732 = vmatpush1.bf16.msra.mxu0 0
        %733 = vmatprep.subr.bf16.mxu0 0
        %734 = vmatpush1.bf16.msra.mxu0 0
        %735 = vmatprep.subr.bf16.mxu0 0
        %736 = vmatpush1.bf16.msra.mxu0 0
        %737 = vmatprep.mubr.bf16.mxu0 0
        %738 = vmatmul.mubr.bf16.gmra.mrb[0].mxu0 %v703
        %v739 = vpop.f32.mrb[0].mxu0
        %v740 = vadd.f32 0.0, %v739
        %v741 = vpop.f32.mrb[0].mxu0
        %v742 = vpop.f32.mrb[0].mxu0
        %v743 = vpop.f32.mrb[0].mxu0
        %744 = vdwg.mxu0
        %v745 = vadd.f32 %v697, %v740
        %v746 = vxor.u32 %v745, 2147483648
        %v747 = vmul.f32 %v746, 1.442695
        %v748 = vpow.pop %v747
        %v749 = vadd.f32 %v748, 1.0
        %v750 = vrcp.pop %v749
        %v751 = vmul.f32 1.0, %v750
        %v752 = vtanh.pop %v745
        %v753 = vmul.f32 %v751, %v688
        %755 = vrot.lane.b32.xlu0 %v752, 32
        %v756 = vpop.permute.xlu0 %755
        %v758 = vmul.f32 %v751, %v756
        %760 = vrot.lane.b32.xlu0 %v758, 32
        %v761 = vpop.permute.xlu0 %760
        %v763 = vadd.f32 %v753, %v761
        %v764 = vtanh.pop %v763
        %766 = vrot.lane.b32.xlu0 %v764, 32
        %v767 = vpop.permute.xlu0 %766
        %v769 = vmul.f32 %v751, %v767
        %s770 = sadd.s32 %s425, 3
        %p771 = scmp.lt.s32.totalorder %s770, 20
        %s772 = scalar_select %p771, 1, 0
        %v773 = vstv %s772
        %vm774 = vcmp.eq.s32.totalorder %v773, 1
        %v775 = vsel %vm774, %v769, %v687
        %v776 = vsel %vm774, %v763, %v688
        %778 = vrot.lane.b32.xlu0 %v775, 64
        %v779 = vpop.permute.xlu0 %778
        %s781 = scalar_lea.vmem %s334, 24 [#allocation7]
        %782 = vst.msk [vmem:[%s781] sm:$0xff] %vm431, %v779
        %s783 = scalar_lea.vmem %s307, 16 [#allocation6]
        %v784 = vld [vmem:[%s783] sm:$0xf]
        %v785 = vunpack.c.l.bf16 %v784
        %v786 = vpack.c.bf16 %v775, %v775
        %788 = vrot.lane.b32.xlu0 %v786, 64
        %v789 = vpop.permute.xlu0 %788
        %v791 = vsel %vm431, %v789, 0
        %793 = vmatprep.subr.bf16.mxu0 0
        %794 = vmatpush1.bf16.msra.mxu0 %v423
        %795 = vmatprep.subr.bf16.mxu0 0
        %796 = vmatpush1.bf16.msra.mxu0 %v424
        %797 = vmatprep.subr.bf16.mxu0 0
        %798 = vmatpush1.bf16.msra.mxu0 0
        %799 = vmatprep.subr.bf16.mxu0 0
        %800 = vmatpush1.bf16.msra.mxu0 0
        %801 = vmatprep.subr.bf16.mxu0 0
        %802 = vmatpush1.bf16.msra.mxu0 0
        %803 = vmatprep.subr.bf16.mxu0 0
        %804 = vmatpush1.bf16.msra.mxu0 0
        %805 = vmatprep.subr.bf16.mxu0 0
        %806 = vmatpush1.bf16.msra.mxu0 0
        %807 = vmatprep.subr.bf16.mxu0 0
        %808 = vmatpush1.bf16.msra.mxu0 0
        %809 = vmatprep.subr.bf16.mxu0 0
        %810 = vmatpush1.bf16.msra.mxu0 0
        %811 = vmatprep.subr.bf16.mxu0 0
        %812 = vmatpush1.bf16.msra.mxu0 0
        %813 = vmatprep.subr.bf16.mxu0 0
        %814 = vmatpush1.bf16.msra.mxu0 0
        %815 = vmatprep.subr.bf16.mxu0 0
        %816 = vmatpush1.bf16.msra.mxu0 0
        %817 = vmatprep.subr.bf16.mxu0 0
        %818 = vmatpush1.bf16.msra.mxu0 0
        %819 = vmatprep.subr.bf16.mxu0 0
        %820 = vmatpush1.bf16.msra.mxu0 0
        %821 = vmatprep.subr.bf16.mxu0 0
        %822 = vmatpush1.bf16.msra.mxu0 0
        %823 = vmatprep.subr.bf16.mxu0 0
        %824 = vmatpush1.bf16.msra.mxu0 0
        %825 = vmatprep.mubr.bf16.mxu0 0
        %826 = vmatmul.mubr.bf16.gmra.mrb[0].mxu0 %v791
        %v827 = vpop.f32.mrb[0].mxu0
        %v828 = vadd.f32 0.0, %v827
        %v829 = vpop.f32.mrb[0].mxu0
        %v830 = vpop.f32.mrb[0].mxu0
        %v831 = vpop.f32.mrb[0].mxu0
        %832 = vdwg.mxu0
        %v833 = vadd.f32 %v785, %v828
        %v834 = vxor.u32 %v833, 2147483648
        %v835 = vmul.f32 %v834, 1.442695
        %v836 = vpow.pop %v835
        %v837 = vadd.f32 %v836, 1.0
        %v838 = vrcp.pop %v837
        %v839 = vmul.f32 1.0, %v838
        %v840 = vtanh.pop %v833
        %v841 = vmul.f32 %v839, %v776
        %843 = vrot.lane.b32.xlu0 %v840, 32
        %v844 = vpop.permute.xlu0 %843
        %v846 = vmul.f32 %v839, %v844
        %848 = vrot.lane.b32.xlu0 %v846, 32
        %v849 = vpop.permute.xlu0 %848
        %v851 = vadd.f32 %v841, %v849
        %v852 = vtanh.pop %v851
        %854 = vrot.lane.b32.xlu0 %v852, 32
        %v855 = vpop.permute.xlu0 %854
        %v857 = vmul.f32 %v839, %v855
        %s858 = sadd.s32 %s425, 4
        %p859 = scmp.lt.s32.totalorder %s858, 20
        %s860 = scalar_select %p859, 1, 0
        %v861 = vstv %s860
        %vm862 = vcmp.eq.s32.totalorder %v861, 1
        %v863 = vsel %vm862, %v857, %v775
        %v864 = vsel %vm862, %v851, %v776
        %866 = vrot.lane.b32.xlu0 %v863, 64
        %v867 = vpop.permute.xlu0 %866
        %s869 = scalar_lea.vmem %s334, 32 [#allocation7]
        %870 = vst.msk [vmem:[%s869] sm:$0xff] %vm431, %v867
        %s871 = scalar_lea.vmem %s307, 20 [#allocation6]
        %v872 = vld [vmem:[%s871] sm:$0xf]
        %v873 = vunpack.c.l.bf16 %v872
        %v874 = vpack.c.bf16 %v863, %v863
        %876 = vrot.lane.b32.xlu0 %v874, 64
        %v877 = vpop.permute.xlu0 %876
        %v879 = vsel %vm431, %v877, 0
        %881 = vmatprep.subr.bf16.mxu0 0
        %882 = vmatpush1.bf16.msra.mxu0 %v423
        %883 = vmatprep.subr.bf16.mxu0 0
        %884 = vmatpush1.bf16.msra.mxu0 %v424
        %885 = vmatprep.subr.bf16.mxu0 0
        %886 = vmatpush1.bf16.msra.mxu0 0
        %887 = vmatprep.subr.bf16.mxu0 0
        %888 = vmatpush1.bf16.msra.mxu0 0
        %889 = vmatprep.subr.bf16.mxu0 0
        %890 = vmatpush1.bf16.msra.mxu0 0
        %891 = vmatprep.subr.bf16.mxu0 0
        %892 = vmatpush1.bf16.msra.mxu0 0
        %893 = vmatprep.subr.bf16.mxu0 0
        %894 = vmatpush1.bf16.msra.mxu0 0
        %895 = vmatprep.subr.bf16.mxu0 0
        %896 = vmatpush1.bf16.msra.mxu0 0
        %897 = vmatprep.subr.bf16.mxu0 0
        %898 = vmatpush1.bf16.msra.mxu0 0
        %899 = vmatprep.subr.bf16.mxu0 0
        %900 = vmatpush1.bf16.msra.mxu0 0
        %901 = vmatprep.subr.bf16.mxu0 0
        %902 = vmatpush1.bf16.msra.mxu0 0
        %903 = vmatprep.subr.bf16.mxu0 0
        %904 = vmatpush1.bf16.msra.mxu0 0
        %905 = vmatprep.subr.bf16.mxu0 0
        %906 = vmatpush1.bf16.msra.mxu0 0
        %907 = vmatprep.subr.bf16.mxu0 0
        %908 = vmatpush1.bf16.msra.mxu0 0
        %909 = vmatprep.subr.bf16.mxu0 0
        %910 = vmatpush1.bf16.msra.mxu0 0
        %911 = vmatprep.subr.bf16.mxu0 0
        %912 = vmatpush1.bf16.msra.mxu0 0
        %913 = vmatprep.mubr.bf16.mxu0 0
        %914 = vmatmul.mubr.bf16.gmra.mrb[0].mxu0 %v879
        %v915 = vpop.f32.mrb[0].mxu0
        %v916 = vadd.f32 0.0, %v915
        %v917 = vpop.f32.mrb[0].mxu0
        %v918 = vpop.f32.mrb[0].mxu0
        %v919 = vpop.f32.mrb[0].mxu0
        %920 = vdwg.mxu0
        %v921 = vadd.f32 %v873, %v916
        %v922 = vxor.u32 %v921, 2147483648
        %v923 = vmul.f32 %v922, 1.442695
        %v924 = vpow.pop %v923
        %v925 = vadd.f32 %v924, 1.0
        %v926 = vrcp.pop %v925
        %v927 = vmul.f32 1.0, %v926
        %v928 = vtanh.pop %v921
        %v929 = vmul.f32 %v927, %v864
        %931 = vrot.lane.b32.xlu0 %v928, 32
        %v932 = vpop.permute.xlu0 %931
        %v934 = vmul.f32 %v927, %v932
        %936 = vrot.lane.b32.xlu0 %v934, 32
        %v937 = vpop.permute.xlu0 %936
        %v939 = vadd.f32 %v929, %v937
        %v940 = vtanh.pop %v939
        %942 = vrot.lane.b32.xlu0 %v940, 32
        %v943 = vpop.permute.xlu0 %942
        %v945 = vmul.f32 %v927, %v943
        %s946 = sadd.s32 %s425, 5
        %p947 = scmp.lt.s32.totalorder %s946, 20
        %s948 = scalar_select %p947, 1, 0
        %v949 = vstv %s948
        %vm950 = vcmp.eq.s32.totalorder %v949, 1
        %v951 = vsel %vm950, %v945, %v863
        %v952 = vsel %vm950, %v939, %v864
        %954 = vrot.lane.b32.xlu0 %v951, 64
        %v955 = vpop.permute.xlu0 %954
        %s957 = scalar_lea.vmem %s334, 40 [#allocation7]
        %958 = vst.msk [vmem:[%s957] sm:$0xff] %vm431, %v955
        %s959 = scalar_lea.vmem %s307, 24 [#allocation6]
        %v960 = vld [vmem:[%s959] sm:$0xf]
        %v961 = vunpack.c.l.bf16 %v960
        %v962 = vpack.c.bf16 %v951, %v951
        %964 = vrot.lane.b32.xlu0 %v962, 64
        %v965 = vpop.permute.xlu0 %964
        %v967 = vsel %vm431, %v965, 0
        %969 = vmatprep.subr.bf16.mxu0 0
        %970 = vmatpush1.bf16.msra.mxu0 %v423
        %971 = vmatprep.subr.bf16.mxu0 0
        %972 = vmatpush1.bf16.msra.mxu0 %v424
        %973 = vmatprep.subr.bf16.mxu0 0
        %974 = vmatpush1.bf16.msra.mxu0 0
        %975 = vmatprep.subr.bf16.mxu0 0
        %976 = vmatpush1.bf16.msra.mxu0 0
        %977 = vmatprep.subr.bf16.mxu0 0
        %978 = vmatpush1.bf16.msra.mxu0 0
        %979 = vmatprep.subr.bf16.mxu0 0
        %980 = vmatpush1.bf16.msra.mxu0 0
        %981 = vmatprep.subr.bf16.mxu0 0
        %982 = vmatpush1.bf16.msra.mxu0 0
        %983 = vmatprep.subr.bf16.mxu0 0
        %984 = vmatpush1.bf16.msra.mxu0 0
        %985 = vmatprep.subr.bf16.mxu0 0
        %986 = vmatpush1.bf16.msra.mxu0 0
        %987 = vmatprep.subr.bf16.mxu0 0
        %988 = vmatpush1.bf16.msra.mxu0 0
        %989 = vmatprep.subr.bf16.mxu0 0
        %990 = vmatpush1.bf16.msra.mxu0 0
        %991 = vmatprep.subr.bf16.mxu0 0
        %992 = vmatpush1.bf16.msra.mxu0 0
        %993 = vmatprep.subr.bf16.mxu0 0
        %994 = vmatpush1.bf16.msra.mxu0 0
        %995 = vmatprep.subr.bf16.mxu0 0
        %996 = vmatpush1.bf16.msra.mxu0 0
        %997 = vmatprep.subr.bf16.mxu0 0
        %998 = vmatpush1.bf16.msra.mxu0 0
        %999 = vmatprep.subr.bf16.mxu0 0
        %1000 = vmatpush1.bf16.msra.mxu0 0
        %1001 = vmatprep.mubr.bf16.mxu0 0
        %1002 = vmatmul.mubr.bf16.gmra.mrb[0].mxu0 %v967
        %v1003 = vpop.f32.mrb[0].mxu0
        %v1004 = vadd.f32 0.0, %v1003
        %v1005 = vpop.f32.mrb[0].mxu0
        %v1006 = vpop.f32.mrb[0].mxu0
        %v1007 = vpop.f32.mrb[0].mxu0
        %1008 = vdwg.mxu0
        %v1009 = vadd.f32 %v961, %v1004
        %v1010 = vxor.u32 %v1009, 2147483648
        %v1011 = vmul.f32 %v1010, 1.442695
        %v1012 = vpow.pop %v1011
        %v1013 = vadd.f32 %v1012, 1.0
        %v1014 = vrcp.pop %v1013
        %v1015 = vmul.f32 1.0, %v1014
        %v1016 = vtanh.pop %v1009
        %v1017 = vmul.f32 %v1015, %v952
        %1019 = vrot.lane.b32.xlu0 %v1016, 32
        %v1020 = vpop.permute.xlu0 %1019
        %v1022 = vmul.f32 %v1015, %v1020
        %1024 = vrot.lane.b32.xlu0 %v1022, 32
        %v1025 = vpop.permute.xlu0 %1024
        %v1027 = vadd.f32 %v1017, %v1025
        %v1028 = vtanh.pop %v1027
        %1030 = vrot.lane.b32.xlu0 %v1028, 32
        %v1031 = vpop.permute.xlu0 %1030
        %v1033 = vmul.f32 %v1015, %v1031
        %s1034 = sadd.s32 %s425, 6
        %p1035 = scmp.lt.s32.totalorder %s1034, 20
        %s1036 = scalar_select %p1035, 1, 0
        %v1037 = vstv %s1036
        %vm1038 = vcmp.eq.s32.totalorder %v1037, 1
        %v1039 = vsel %vm1038, %v1033, %v951
        %v1040 = vsel %vm1038, %v1027, %v952
        %1042 = vrot.lane.b32.xlu0 %v1039, 64
        %v1043 = vpop.permute.xlu0 %1042
        %s1045 = scalar_lea.vmem %s334, 48 [#allocation7]
        %1046 = vst.msk [vmem:[%s1045] sm:$0xff] %vm431, %v1043
        %s1047 = scalar_lea.vmem %s307, 28 [#allocation6]
        %v1048 = vld [vmem:[%s1047] sm:$0xf]
        %v1049 = vunpack.c.l.bf16 %v1048
        %v1050 = vpack.c.bf16 %v1039, %v1039
        %1052 = vrot.lane.b32.xlu0 %v1050, 64
        %v1053 = vpop.permute.xlu0 %1052
        %v1055 = vsel %vm431, %v1053, 0
        %1057 = vmatprep.subr.bf16.mxu0 0
        %1058 = vmatpush1.bf16.msra.mxu0 %v423
        %1059 = vmatprep.subr.bf16.mxu0 0
        %1060 = vmatpush1.bf16.msra.mxu0 %v424
        %1061 = vmatprep.subr.bf16.mxu0 0
        %1062 = vmatpush1.bf16.msra.mxu0 0
        %1063 = vmatprep.subr.bf16.mxu0 0
        %1064 = vmatpush1.bf16.msra.mxu0 0
        %1065 = vmatprep.subr.bf16.mxu0 0
        %1066 = vmatpush1.bf16.msra.mxu0 0
        %1067 = vmatprep.subr.bf16.mxu0 0
        %1068 = vmatpush1.bf16.msra.mxu0 0
        %1069 = vmatprep.subr.bf16.mxu0 0
        %1070 = vmatpush1.bf16.msra.mxu0 0
        %1071 = vmatprep.subr.bf16.mxu0 0
        %1072 = vmatpush1.bf16.msra.mxu0 0
        %1073 = vmatprep.subr.bf16.mxu0 0
        %1074 = vmatpush1.bf16.msra.mxu0 0
        %1075 = vmatprep.subr.bf16.mxu0 0
        %1076 = vmatpush1.bf16.msra.mxu0 0
        %1077 = vmatprep.subr.bf16.mxu0 0
        %1078 = vmatpush1.bf16.msra.mxu0 0
        %1079 = vmatprep.subr.bf16.mxu0 0
        %1080 = vmatpush1.bf16.msra.mxu0 0
        %1081 = vmatprep.subr.bf16.mxu0 0
        %1082 = vmatpush1.bf16.msra.mxu0 0
        %1083 = vmatprep.subr.bf16.mxu0 0
        %1084 = vmatpush1.bf16.msra.mxu0 0
        %1085 = vmatprep.subr.bf16.mxu0 0
        %1086 = vmatpush1.bf16.msra.mxu0 0
        %1087 = vmatprep.subr.bf16.mxu0 0
        %1088 = vmatpush1.bf16.msra.mxu0 0
        %1089 = vmatprep.mubr.bf16.mxu0 0
        %1090 = vmatmul.mubr.bf16.gmra.mrb[0].mxu0 %v1055
        %v1091 = vpop.f32.mrb[0].mxu0
        %v1092 = vadd.f32 0.0, %v1091
        %v1093 = vpop.f32.mrb[0].mxu0
        %v1094 = vpop.f32.mrb[0].mxu0
        %v1095 = vpop.f32.mrb[0].mxu0
        %1096 = vdwg.mxu0
        %v1097 = vadd.f32 %v1049, %v1092
        %v1098 = vxor.u32 %v1097, 2147483648
        %v1099 = vmul.f32 %v1098, 1.442695
        %v1100 = vpow.pop %v1099
        %v1101 = vadd.f32 %v1100, 1.0
        %v1102 = vrcp.pop %v1101
        %v1103 = vmul.f32 1.0, %v1102
        %v1104 = vtanh.pop %v1097
        %v1105 = vmul.f32 %v1103, %v1040
        %1107 = vrot.lane.b32.xlu0 %v1104, 32
        %v1108 = vpop.permute.xlu0 %1107
        %v1110 = vmul.f32 %v1103, %v1108
        %1112 = vrot.lane.b32.xlu0 %v1110, 32
        %v1113 = vpop.permute.xlu0 %1112
        %v1115 = vadd.f32 %v1105, %v1113
        %v1116 = vtanh.pop %v1115
        %1118 = vrot.lane.b32.xlu0 %v1116, 32
        %v1119 = vpop.permute.xlu0 %1118
        %v1121 = vmul.f32 %v1103, %v1119
        %s1122 = sadd.s32 %s425, 7
        %p1123 = scmp.lt.s32.totalorder %s1122, 20
        %s1124 = scalar_select %p1123, 1, 0
        %v1125 = vstv %s1124
        %vm1126 = vcmp.eq.s32.totalorder %v1125, 1
        %v1127 = vsel %vm1126, %v1121, %v1039
        %v1128 = vsel %vm1126, %v1115, %v1040
        %1130 = vrot.lane.b32.xlu0 %v1127, 64
        %v1131 = vpop.permute.xlu0 %1130
        %s1133 = scalar_lea.vmem %s334, 56 [#allocation7]
        %1134 = vst.msk [vmem:[%s1133] sm:$0xff] %vm431, %v1131
        %1135 = vst.msk [vmem:[#allocation4] sm:$0xff] %vm431, %v1131
        %1137 = vrot.lane.b32.xlu0 %v1128, 96
        %v1138 = vpop.permute.xlu0 %1137
        %1140 = vst.msk [vmem:[#allocation5] sm:$0xff] %vm431, %v1138
        %1141 = vst.msk [vmem:[%s360] sm:$0xff] %vm431, %v1131
        %1142 = vst.msk [vmem:[%s364] sm:$0xff] %vm431, %v1138
        %s1143 = sand.u32 %s120, 1
        %s1144 = sand.u32 %s120, 1
        %s1145 = smul.addr %s1144, 64
        %s1146 = scalar_lea.vmem [#allocation7], %s1145
        %p1147 = scmp.lt.s32.totalorder %s22, 1
        %s1148 = scalar_select %p1147, %s22, 1
        %s1149 = smul.addr %s1148, 8
        %s1150 = scalar_lea.vmem %s5, %s1149
        %p1151 = scmp.lt.s32.totalorder %s22, 1
        %s1152 = scalar_select %p1151, %s22, 1
        %s1153 = smul.addr %s1152, 8
        %s1154 = scalar_lea.vmem %s6, %s1153
        // Predicated region
        $region112: #{lstm_forward.2} parent=68 // pred_check
          %p1155 = pneg %p130
        $region113: #{lstm_forward.2} parent=68 // pred_check_branch
          %1157 = sbr.rel (%p1155) target = $region115
        $region114: #{lstm_forward.2} parent=68 // pred_region
          %s1158 = smul.u32 8, %s23
          %s1159 = smul.addr %s1158, 2
          %s1160 = sadd.s32 %s22, %s1159
          %s1161 = smul.addr %s1160, 8
          %s1162 = scalar_lea.vmem %s4, %s1161
          // Predicated region
          $region116: #{lstm_forward.2} parent=114 // pred_check
            _
          $region117: #{lstm_forward.2} parent=114 // pred_check_branch
            %1164 = sbr.rel (0) target = $region119
          $region118: #{lstm_forward.2} parent=114 // pred_region
            // Predicated region
            $region120: #{lstm_forward.2} parent=118 // pred_check
              _
            $region121: #{lstm_forward.2} parent=118 // pred_check_branch
              %1166 = sbr.rel (0) target = $region123
            $region122: #{lstm_forward.2} parent=118 // pred_region
              // Predicated region
              $region135: #{lstm_forward.2} parent=122 // pred_check
                _
              $region136: #{lstm_forward.2} parent=122 // pred_check_branch
                %1195 = sbr.rel (0) target = $region138
              $region137: #{lstm_forward.2} parent=122 // pred_region
                loop: start=0, step=1, limit=1
                $region139: #{lstm_forward.2} parent=137 // loop_pre_header
                  _
                $region140: #{lstm_forward.2} parent=137 // loop_header
                  %s1197 = sphi 0, %s1201
                  %p1198 = scmp.ge.s32.totalorder %s1197, 1
                  %s1202 = sphi %s1146, %s1146
                  %s1203 = sphi %s1162, %s1162
                $region141: #{lstm_forward.2} parent=137 // loop_header_branch
                  %1200 = sbr.rel (%p1198) target = $region145
                $region142: #{lstm_forward.2} parent=137 // loop_body
                  %v1204 = vld [vmem:[%s1202] sm:$0xff]
                  %1205 = vst [vmem:[%s1203] sm:$0xff] %v1204
                  %v1206 = vld [vmem:[%s1202 + $0x8] sm:$0xff]
                  %1207 = vst [vmem:[%s1203 + $0x10] sm:$0xff] %v1206
                  %v1208 = vld [vmem:[%s1202 + $0x10] sm:$0xff]
                  %1209 = vst [vmem:[%s1203 + $0x20] sm:$0xff] %v1208
                  %v1210 = vld [vmem:[%s1202 + $0x18] sm:$0xff]
                  %1211 = vst [vmem:[%s1203 + $0x30] sm:$0xff] %v1210
                  %v1212 = vld [vmem:[%s1202 + $0x20] sm:$0xff]
                  %1213 = vst [vmem:[%s1203 + $0x40] sm:$0xff] %v1212
                  %v1214 = vld [vmem:[%s1202 + $0x28] sm:$0xff]
                  %1215 = vst [vmem:[%s1203 + $0x50] sm:$0xff] %v1214
                  %v1216 = vld [vmem:[%s1202 + $0x30] sm:$0xff]
                  %1217 = vst [vmem:[%s1203 + $0x60] sm:$0xff] %v1216
                  %v1218 = vld [vmem:[%s1202 + $0x38] sm:$0xff]
                  %1219 = vst [vmem:[%s1203 + $0x70] sm:$0xff] %v1218
                $region143: #{lstm_forward.2} parent=137 // loop_footer
                  %s1201 = sadd.s32 1, %s1197
                $region144: #{lstm_forward.2} parent=137 // loop_footer_branch
                  %1196 = sbr.rel target = $region140
                $region145: #{lstm_forward.2} parent=137 // loop_exit
                  _
              $region138: #{lstm_forward.2} parent=122 // pred_fallthru
                _
              // Predicated region
              $region146: #{lstm_forward.2} parent=122 // pred_check
                _
              $region147: #{lstm_forward.2} parent=122 // pred_check_branch
                %1221 = sbr.rel target = $region149
              $region148: #{lstm_forward.2} parent=122 // pred_region
                _
              $region149: #{lstm_forward.2} parent=122 // pred_fallthru
                _
            $region123: #{lstm_forward.2} parent=118 // pred_fallthru
              _
            // Predicated region
            $region124: #{lstm_forward.2} parent=118 // pred_check
              _
            $region125: #{lstm_forward.2} parent=118 // pred_check_branch
              %1168 = sbr.rel target = $region127
            $region126: #{lstm_forward.2} parent=118 // pred_region
              loop: start=0, step=1, limit=1
              $region128: #{lstm_forward.2} parent=126 // loop_pre_header
                _
              $region129: #{lstm_forward.2} parent=126 // loop_header
                %s1171 = sphi 0, %s1175
                %p1172 = scmp.ge.s32.totalorder %s1171, 1
                %s1176 = sphi %s1146, %s1146
                %s1177 = sphi %s1162, %s1162
              $region130: #{lstm_forward.2} parent=126 // loop_header_branch
                %1174 = sbr.rel (%p1172) target = $region134
              $region131: #{lstm_forward.2} parent=126 // loop_body
                %v1178 = vld [vmem:[%s1176] sm:$0xff]
                %1179 = vst [vmem:[%s1177] sm:$0xff] %v1178
                %v1180 = vld [vmem:[%s1176 + $0x8] sm:$0xff]
                %1181 = vst [vmem:[%s1177 + $0x10] sm:$0xff] %v1180
                %v1182 = vld [vmem:[%s1176 + $0x10] sm:$0xff]
                %1183 = vst [vmem:[%s1177 + $0x20] sm:$0xff] %v1182
                %v1184 = vld [vmem:[%s1176 + $0x18] sm:$0xff]
                %1185 = vst [vmem:[%s1177 + $0x30] sm:$0xff] %v1184
                %v1186 = vld [vmem:[%s1176 + $0x20] sm:$0xff]
                %1187 = vst [vmem:[%s1177 + $0x40] sm:$0xff] %v1186
                %v1188 = vld [vmem:[%s1176 + $0x28] sm:$0xff]
                %1189 = vst [vmem:[%s1177 + $0x50] sm:$0xff] %v1188
                %v1190 = vld [vmem:[%s1176 + $0x30] sm:$0xff]
                %1191 = vst [vmem:[%s1177 + $0x60] sm:$0xff] %v1190
                %v1192 = vld [vmem:[%s1176 + $0x38] sm:$0xff]
                %1193 = vst [vmem:[%s1177 + $0x70] sm:$0xff] %v1192
              $region132: #{lstm_forward.2} parent=126 // loop_footer
                %s1175 = sadd.s32 1, %s1171
              $region133: #{lstm_forward.2} parent=126 // loop_footer_branch
                %1170 = sbr.rel target = $region129
              $region134: #{lstm_forward.2} parent=126 // loop_exit
                _
            $region127: #{lstm_forward.2} parent=118 // pred_fallthru
              _
          $region119: #{lstm_forward.2} parent=114 // pred_fallthru
            _
          %1222 = vnop
        $region115: #{lstm_forward.2} parent=68 // pred_fallthru
          _
        // Predicated region
        $region150: #{lstm_forward.2} parent=68 // pred_check
          %p1223 = pneg %p156
        $region151: #{lstm_forward.2} parent=68 // pred_check_branch
          %1225 = sbr.rel (%p1223) target = $region153
        $region152: #{lstm_forward.2} parent=68 // pred_region
          _
        $region153: #{lstm_forward.2} parent=68 // pred_fallthru
          _
        // Predicated region
        $region154: #{lstm_forward.2} parent=68 // pred_check
          %p1226 = pneg %p182
        $region155: #{lstm_forward.2} parent=68 // pred_check_branch
          %1228 = sbr.rel (%p1226) target = $region157
        $region156: #{lstm_forward.2} parent=68 // pred_region
          _
        $region157: #{lstm_forward.2} parent=68 // pred_fallthru
          _
      $region69: #{lstm_forward.2} parent=5 // pred_fallthru
        _
      %p1229 = scmp.le.s32.totalorder 2, %s13
      // Predicated region
      $region158: #{lstm_forward.2} parent=5 // pred_check
        %p1230 = pneg %p1229
      $region159: #{lstm_forward.2} parent=5 // pred_check_branch
        %1232 = sbr.rel (%p1230) target = $region161
      $region160: #{lstm_forward.2} parent=5 // pred_region
        %s1233 = ssub.s32 %s13, 2
        // Predicated region
        $region162: #{lstm_forward.2} parent=160 // pred_check
          %p1234 = pneg %p136
        $region163: #{lstm_forward.2} parent=160 // pred_check_branch
          %1236 = sbr.rel (%p1234) target = $region165
        $region164: #{lstm_forward.2} parent=160 // pred_region
          %s1237 = sand.u32 %s121, 1
          %s1238 = sand.u32 %s121, 1
          %s1239 = smul.addr %s1238, 64
          %s1240 = scalar_lea.vmem [#allocation7], %s1239
        $region165: #{lstm_forward.2} parent=160 // pred_fallthru
          _
        // Predicated region
        $region166: #{lstm_forward.2} parent=160 // pred_check
          %p1241 = pneg %p162
        $region167: #{lstm_forward.2} parent=160 // pred_check_branch
          %1243 = sbr.rel (%p1241) target = $region169
        $region168: #{lstm_forward.2} parent=160 // pred_region
          %p1244 = scmp.lt.s32.totalorder %s24, 1
          %s1245 = scalar_select %p1244, %s24, 1
          %s1246 = smul.addr %s1245, 8
          %s1247 = scalar_lea.vmem %s5, %s1246
        $region169: #{lstm_forward.2} parent=160 // pred_fallthru
          _
        // Predicated region
        $region170: #{lstm_forward.2} parent=160 // pred_check
          %p1248 = pneg %p188
        $region171: #{lstm_forward.2} parent=160 // pred_check_branch
          %1250 = sbr.rel (%p1248) target = $region173
        $region172: #{lstm_forward.2} parent=160 // pred_region
          %p1251 = scmp.lt.s32.totalorder %s24, 1
          %s1252 = scalar_select %p1251, %s24, 1
          %s1253 = smul.addr %s1252, 8
          %s1254 = scalar_lea.vmem %s6, %s1253
        $region173: #{lstm_forward.2} parent=160 // pred_fallthru
          _
      $region161: #{lstm_forward.2} parent=5 // pred_fallthru
        _
    $region6: #{lstm_forward.2} parent=1 // loop_footer
      %s17 = sadd.s32 1, %s13
    $region7: #{lstm_forward.2} parent=1 // loop_footer_branch
      %12 = sbr.rel target = $region3
    $region8: #{lstm_forward.2} parent=1 // loop_exit
      _
  %1255 = vsyncmov [#allocation3]
  %s1256 = vpop.sfrf %1255
  %p1257 = scmp.eq.s32.totalorder %s1256, 0
  %p1258 = pneg %p1257
  %1260 = shalt.err (%p1258)

</llo_original>
